<compile_context>
chip_gen: v5e
topology: v5e:2x2
jax: 0.10.0
libtpu: 0.0.40
codegen_flags: <defaults>
</compile_context>

<pallas_src>
import jax
import jax.numpy as jnp
import numpy as np
from jax.experimental import pallas as pl
from jax.experimental.pallas import tpu as pltpu


# ------------------------------- helpers -----------------------------------

def _round_up(a, b):
    return (a + b - 1) // b * b


def _fold_bn(w, b, gamma, beta, mean, var, eps=1e-5):
    """Fold eval-mode BatchNorm2d into a conv weight/bias (per out-channel)."""
    s = gamma / jnp.sqrt(var + eps)
    return w * s[:, None, None, None], b * s + (beta - mean * s)


# ------------------------------ Pallas kernel -------------------------------

def _make_kernel(KK, K, Wpad, Nk, dres, mode):
    """Implicit-GEMM conv + BN + ReLU (+ residual) kernel, one residual mode."""

    def conv(x_ref, wtap_ref, bm_ref):
        # x_ref:    (Cin, Lext)     flattened reflect-padded input (one batch)
        # wtap_ref: (KK, CoT, Cin)  BN-folded conv weight per tap
        # bm_ref:   (CoT, 1)        BN-folded conv bias (f32)
        acc = None
        for t in range(KK):                       # static tap loop (unrolled)
            d = (t // K) * Wpad + (t % K)         # lane offset of this tap
            part = jnp.dot(wtap_ref[t], x_ref[:, d:d + Nk],
                           preferred_element_type=jnp.float32)
            acc = part if acc is None else acc + part
        return jnp.maximum(acc + bm_ref[...], 0.0)        # f32 bias + ReLU

    if mode == "proj":                            # BN(Conv1x1(x)) residual
        def kernel(x_ref, wtap_ref, bm_ref, wres_ref, br_ref, out_ref):
            y = conv(x_ref, wtap_ref, bm_ref)
            r = jnp.dot(wres_ref[...], x_ref[:, dres:dres + Nk],
                        preferred_element_type=jnp.float32) + br_ref[...]
            out_ref[...] = (y + r).astype(out_ref.dtype)
    elif mode == "identity":                      # identity residual: VPU add
        def kernel(x_ref, wtap_ref, bm_ref, out_ref):
            y = conv(x_ref, wtap_ref, bm_ref)
            r = x_ref[:, dres:dres + Nk].astype(jnp.float32)
            out_ref[...] = (y + r).astype(out_ref.dtype)
    else:                                         # residual = 0
        def kernel(x_ref, wtap_ref, bm_ref, out_ref):
            out_ref[...] = conv(x_ref, wtap_ref, bm_ref).astype(out_ref.dtype)
    return kernel


# ------------------------------- JAX wrapper --------------------------------

def conv2d_res_layer(x, main_params, res_params=None, *, kernel_size, stride,
                     padding, residual=True, eps=1e-5, stream_dtype=None):
    """x: (B, Cin, H, W) NCHW. Returns (B, Cout, Hout, Wout)."""
    B, Cin, H, W = x.shape
    K, p = kernel_size, padding
    wc, bc, g, bt, mu, var = main_params
    Cout = wc.shape[0]
    out_dtype = x.dtype
    if stream_dtype is None:
        stream_dtype = x.dtype                     # bf16 recommended on v6e/v7x

    Hpad, Wpad = H + 2 * p, W + 2 * p
    Ho, Wo = Hpad - K + 1, Wpad - K + 1            # stride-1 conv output size
    if Ho <= 0 or Wo <= 0:
        raise ValueError("kernel larger than padded input")

    # residual mode (mirrors the PyTorch module)
    if not residual:
        mode = "none"
    elif Cin == Cout:
        mode = "identity"
    else:
        if res_params is None:
            raise ValueError("res_params required when in_channels != out_channels")
        mode = "proj"
    if mode != "none" and (stride != 1 or Ho != H or Wo != W):
        raise ValueError("residual add requires matching spatial dims "
                         "(stride=1 and 2*padding == kernel_size-1)")

    # --- fold main-path BatchNorm, lay weights out per tap: (K*K, Cout, Cin) ---
    wm, bm = _fold_bn(wc, bc, g, bt, mu, var, eps)
    KK = K * K
    wtap = jnp.transpose(wm, (2, 3, 0, 1)).reshape(KK, Cout, Cin).astype(stream_dtype)
    bm2 = bm.reshape(Cout, 1).astype(jnp.float32)

    # --- reflect pad + flatten spatial dims (the ONLY activation copy in HBM) ---
    # tap (kh,kw) of the conv becomes a static lane offset kh*Wpad+kw of this slab
    Nk = _round_up(Ho * Wpad, 128)                 # lane-dense kernel output width
    dmax = (K - 1) * (Wpad + 1)                    # largest tap offset
    Lext = _round_up(Nk + dmax, 128)               # input slab width (zero tail)
    xp = jnp.pad(x, ((0, 0), (0, 0), (p, p), (p, p)), mode="reflect")
    xflat = xp.reshape(B, Cin, Hpad * Wpad)
    xflat = jnp.pad(xflat, ((0, 0), (0, 0), (0, Lext - Hpad * Wpad))).astype(stream_dtype)

    dres = p * (Wpad + 1)                          # offset of interior (un-padded) pixels

    # --- Cout tiling: only when large (MXU geometry / VMEM); grid is (B, n_co) ---
    cout_tile = Cout
    if mode != "identity":
        for t in (256, 128):
            if Cout > t and Cout % t == 0:
                cout_tile = t
                break
    n_co = Cout // cout_tile

    kernel = _make_kernel(KK, K, Wpad, Nk, dres, mode)

    in_specs = [
        pl.BlockSpec((None, Cin, Lext), lambda b, c: (b, 0, 0)),     # padded input
        pl.BlockSpec((KK, cout_tile, Cin), lambda b, c: (0, c, 0)),  # conv weights
        pl.BlockSpec((cout_tile, 1), lambda b, c: (c, 0)),           # conv bias
    ]
    args = [xflat, wtap, bm2]
    if mode == "proj":
        wr, brc, gr, btr, mur, varr = res_params
        wrf, br = _fold_bn(wr, brc, gr, btr, mur, varr, eps)
        args += [wrf.reshape(Cout, Cin).astype(stream_dtype),
                 br.reshape(Cout, 1).astype(jnp.float32)]
        in_specs += [pl.BlockSpec((cout_tile, Cin), lambda b, c: (c, 0)),
                     pl.BlockSpec((cout_tile, 1), lambda b, c: (c, 0))]

    out_flat = pl.pallas_call(
        kernel,
        out_shape=jax.ShapeDtypeStruct((B, Cout, Nk), out_dtype),
        grid=(B, n_co),
        in_specs=in_specs,
        out_specs=pl.BlockSpec((None, cout_tile, Nk), lambda b, c: (b, c, 0)),
        compiler_params=pltpu.CompilerParams(
            dimension_semantics=("parallel", "parallel"),
            vmem_limit_bytes=32 * 1024 * 1024),
    )(*args)

    # Kernel output is already NCHW-ordered; just crop the padded columns.
    out = out_flat[:, :, :Ho * Wpad].reshape(B, Cout, Ho, Wpad)[:, :, :, :Wo]
    if stride > 1:                                  # only reachable with residual=False
        out = out[:, :, ::stride, ::stride]
    return out


# --------------------------- pure-JAX reference -----------------------------

def reference(x, main_params, res_params=None, *, kernel_size, stride, padding,
              residual=True, eps=1e-5):
    wc, bc, g, bt, mu, var = main_params
    p = padding
    xp = jnp.pad(x, ((0, 0), (0, 0), (p, p), (p, p)), mode="reflect")
    y = jax.lax.conv_general_dilated(xp, wc, (stride, stride), "VALID",
                                     dimension_numbers=("NCHW", "OIHW", "NCHW"))
    y = y + bc[None, :, None, None]
    s = g / jnp.sqrt(var + eps)
    y = y * s[None, :, None, None] + (bt - mu * s)[None, :, None, None]
    y = jnp.maximum(y, 0.0)
    if not residual:
        r = 0.0
    elif x.shape[1] == wc.shape[0]:
        r = x
    else:
        wr, brc, gr, btr, mur, varr = res_params
        r = jax.lax.conv_general_dilated(x, wr, (1, 1), "VALID",
                                         dimension_numbers=("NCHW", "OIHW", "NCHW"))
        r = r + brc[None, :, None, None]
        sr = gr / jnp.sqrt(varr + eps)
        r = r * sr[None, :, None, None] + (btr - mur * sr)[None, :, None, None]
    return y + r


# ---------------------------------- main ------------------------------------

def _rand_bn_conv(key, cout, cin, k, dtype):
    ks = jax.random.split(key, 6)

    def rnd(kk, shape, scale=0.1):
        return (jax.random.normal(kk, shape, jnp.float32) * scale).astype(dtype)

    return (rnd(ks[0], (cout, cin, k, k)),           # conv weight
            rnd(ks[1], (cout,)),                     # conv bias
            1.0 + rnd(ks[2], (cout,)),               # bn gamma
            rnd(ks[3], (cout,)),                     # bn beta
            rnd(ks[4], (cout,)),                     # bn running_mean
            1.0 + jnp.abs(rnd(ks[5], (cout,))))      # bn running_var (> 0)


if __name__ == "__main__":
    dtype = jnp.float32
    root = jax.random.PRNGKey(0)
    k_m1, k_r1, k_x1, k_m2, k_x2, k_m3, k_x3 = jax.random.split(root, 7)

    def check(out, ref, name):
        out = np.asarray(jax.block_until_ready(out))
        if not np.allclose(out, np.asarray(ref), atol=2e-4, rtol=2e-4):
            raise AssertionError(f"Pallas kernel mismatch vs reference ({name})")

    B, Cin, Cout, H, W, K = 2, 4, 8, 16, 16, 3

    # 1) Cin != Cout : Conv1x1 + BN projection residual
    main_p = _rand_bn_conv(k_m1, Cout, Cin, K, dtype)
    res_p = _rand_bn_conv(k_r1, Cout, Cin, 1, dtype)
    x = jax.random.normal(k_x1, (B, Cin, H, W), dtype)
    out = conv2d_res_layer(x, main_p, res_p, kernel_size=K, stride=1, padding=1,
                           residual=True)
    check(out, reference(x, main_p, res_p, kernel_size=K, stride=1, padding=1,
                         residual=True), "proj-residual")

    # 2) Cin == Cout : identity residual (in-kernel VPU add, no extra stream)
    C = 8
    main_p2 = _rand_bn_conv(k_m2, C, C, K, dtype)
    x2 = jax.random.normal(k_x2, (B, C, H, W), dtype)
    out2 = conv2d_res_layer(x2, main_p2, None, kernel_size=K, stride=1, padding=1,
                            residual=True)
    check(out2, reference(x2, main_p2, None, kernel_size=K, stride=1, padding=1,
                          residual=True), "identity-residual")

    # 3) residual=False, stride=2 : conv-only kernel + host-side subsample
    main_p3 = _rand_bn_conv(k_m3, Cout, Cin, K, dtype)
    x3 = jax.random.normal(k_x3, (B, Cin, H, W), dtype)
    out3 = conv2d_res_layer(x3, main_p3, None, kernel_size=K, stride=2, padding=1,
                            residual=False)
    check(out3, reference(x3, main_p3, None, kernel_size=K, stride=2, padding=1,
                          residual=False), "no-residual-stride2")

    print("KERNEL_OK")
</pallas_src>

<mosaic_0001>
module attributes {stable_mosaic.version = 11 : i64} {
  func.func @kernel(%arg0: i32, %arg1: i32, %arg2: memref<1x4x512xf32, #tpu.memory_space<vmem>>, %arg3: memref<9x8x4xf32, #tpu.memory_space<vmem>>, %arg4: memref<8x1xf32, #tpu.memory_space<vmem>>, %arg5: memref<8x4xf32, #tpu.memory_space<vmem>>, %arg6: memref<8x1xf32, #tpu.memory_space<vmem>>, %arg7: memref<1x8x384xf32, #tpu.memory_space<vmem>>) attributes {dimension_semantics = [#tpu.dimension_semantics<parallel>, #tpu.dimension_semantics<parallel>], iteration_bounds = array<i64: 2, 1>, scalar_prefetch = 0 : i64, scratch_operands = 0 : i64, tpu.core_type = #tpu.core_type<tc>, window_params = [{transform_indices = @transform_0, window_bounds = array<i64: 1, 4, 512>}, {transform_indices = @transform_1, window_bounds = array<i64: 9, 8, 4>}, {transform_indices = @transform_2, window_bounds = array<i64: 8, 1>}, {transform_indices = @transform_3, window_bounds = array<i64: 8, 4>}, {transform_indices = @transform_4, window_bounds = array<i64: 8, 1>}, {transform_indices = @transform_5, window_bounds = array<i64: 1, 8, 384>}]} {
    %c0 = arith.constant 0 : index
    %c0_0 = arith.constant 0 : index
    %c0_1 = arith.constant 0 : index
    %0 = vector.load %arg3[%c0, %c0_0, %c0_1] : memref<9x8x4xf32, #tpu.memory_space<vmem>>, vector<1x8x4xf32>
    %1 = vector.shape_cast %0 : vector<1x8x4xf32> to vector<8x4xf32>
    %c0_2 = arith.constant 0 : index
    %c0_3 = arith.constant 0 : index
    %c0_4 = arith.constant 0 : index
    %2 = vector.load %arg2[%c0_2, %c0_3, %c0_4] : memref<1x4x512xf32, #tpu.memory_space<vmem>>, vector<1x4x384xf32>
    %3 = vector.shape_cast %2 : vector<1x4x384xf32> to vector<4x384xf32>
    %cst = arith.constant dense<0.000000e+00> : vector<8x384xf32>
    %4 = tpu.matmul %1, %3, %cst {dimension_numbers = #tpu.dot_dimension_numbers<[1], [0], [0], [1], [0, 0, 1, 1], [], []>} : vector<8x4xf32>, vector<4x384xf32>, vector<8x384xf32> -> vector<8x384xf32>
    %c1 = arith.constant 1 : index
    %c0_5 = arith.constant 0 : index
    %c0_6 = arith.constant 0 : index
    %5 = vector.load %arg3[%c1, %c0_5, %c0_6] : memref<9x8x4xf32, #tpu.memory_space<vmem>>, vector<1x8x4xf32>
    %6 = vector.shape_cast %5 : vector<1x8x4xf32> to vector<8x4xf32>
    %c0_7 = arith.constant 0 : index
    %c0_8 = arith.constant 0 : index
    %c1_9 = arith.constant 1 : index
    %7 = vector.load %arg2[%c0_7, %c0_8, %c1_9] : memref<1x4x512xf32, #tpu.memory_space<vmem>>, vector<1x4x384xf32>
    %8 = vector.shape_cast %7 : vector<1x4x384xf32> to vector<4x384xf32>
    %cst_10 = arith.constant dense<0.000000e+00> : vector<8x384xf32>
    %9 = tpu.matmul %6, %8, %cst_10 {dimension_numbers = #tpu.dot_dimension_numbers<[1], [0], [0], [1], [0, 0, 1, 1], [], []>} : vector<8x4xf32>, vector<4x384xf32>, vector<8x384xf32> -> vector<8x384xf32>
    %10 = arith.addf %4, %9 : vector<8x384xf32>
    %c2 = arith.constant 2 : index
    %c0_11 = arith.constant 0 : index
    %c0_12 = arith.constant 0 : index
    %11 = vector.load %arg3[%c2, %c0_11, %c0_12] : memref<9x8x4xf32, #tpu.memory_space<vmem>>, vector<1x8x4xf32>
    %12 = vector.shape_cast %11 : vector<1x8x4xf32> to vector<8x4xf32>
    %c0_13 = arith.constant 0 : index
    %c0_14 = arith.constant 0 : index
    %c2_15 = arith.constant 2 : index
    %13 = vector.load %arg2[%c0_13, %c0_14, %c2_15] : memref<1x4x512xf32, #tpu.memory_space<vmem>>, vector<1x4x384xf32>
    %14 = vector.shape_cast %13 : vector<1x4x384xf32> to vector<4x384xf32>
    %cst_16 = arith.constant dense<0.000000e+00> : vector<8x384xf32>
    %15 = tpu.matmul %12, %14, %cst_16 {dimension_numbers = #tpu.dot_dimension_numbers<[1], [0], [0], [1], [0, 0, 1, 1], [], []>} : vector<8x4xf32>, vector<4x384xf32>, vector<8x384xf32> -> vector<8x384xf32>
    %16 = arith.addf %10, %15 : vector<8x384xf32>
    %c3 = arith.constant 3 : index
    %c0_17 = arith.constant 0 : index
    %c0_18 = arith.constant 0 : index
    %17 = vector.load %arg3[%c3, %c0_17, %c0_18] : memref<9x8x4xf32, #tpu.memory_space<vmem>>, vector<1x8x4xf32>
    %18 = vector.shape_cast %17 : vector<1x8x4xf32> to vector<8x4xf32>
    %c0_19 = arith.constant 0 : index
    %c0_20 = arith.constant 0 : index
    %c18 = arith.constant 18 : index
    %19 = vector.load %arg2[%c0_19, %c0_20, %c18] : memref<1x4x512xf32, #tpu.memory_space<vmem>>, vector<1x4x384xf32>
    %20 = vector.shape_cast %19 : vector<1x4x384xf32> to vector<4x384xf32>
    %cst_21 = arith.constant dense<0.000000e+00> : vector<8x384xf32>
    %21 = tpu.matmul %18, %20, %cst_21 {dimension_numbers = #tpu.dot_dimension_numbers<[1], [0], [0], [1], [0, 0, 1, 1], [], []>} : vector<8x4xf32>, vector<4x384xf32>, vector<8x384xf32> -> vector<8x384xf32>
    %22 = arith.addf %16, %21 : vector<8x384xf32>
    %c4 = arith.constant 4 : index
    %c0_22 = arith.constant 0 : index
    %c0_23 = arith.constant 0 : index
    %23 = vector.load %arg3[%c4, %c0_22, %c0_23] : memref<9x8x4xf32, #tpu.memory_space<vmem>>, vector<1x8x4xf32>
    %24 = vector.shape_cast %23 : vector<1x8x4xf32> to vector<8x4xf32>
    %c0_24 = arith.constant 0 : index
    %c0_25 = arith.constant 0 : index
    %c19 = arith.constant 19 : index
    %25 = vector.load %arg2[%c0_24, %c0_25, %c19] : memref<1x4x512xf32, #tpu.memory_space<vmem>>, vector<1x4x384xf32>
    %26 = vector.shape_cast %25 : vector<1x4x384xf32> to vector<4x384xf32>
    %cst_26 = arith.constant dense<0.000000e+00> : vector<8x384xf32>
    %27 = tpu.matmul %24, %26, %cst_26 {dimension_numbers = #tpu.dot_dimension_numbers<[1], [0], [0], [1], [0, 0, 1, 1], [], []>} : vector<8x4xf32>, vector<4x384xf32>, vector<8x384xf32> -> vector<8x384xf32>
    %28 = arith.addf %22, %27 : vector<8x384xf32>
    %c5 = arith.constant 5 : index
    %c0_27 = arith.constant 0 : index
    %c0_28 = arith.constant 0 : index
    %29 = vector.load %arg3[%c5, %c0_27, %c0_28] : memref<9x8x4xf32, #tpu.memory_space<vmem>>, vector<1x8x4xf32>
    %30 = vector.shape_cast %29 : vector<1x8x4xf32> to vector<8x4xf32>
    %c0_29 = arith.constant 0 : index
    %c0_30 = arith.constant 0 : index
    %c20 = arith.constant 20 : index
    %31 = vector.load %arg2[%c0_29, %c0_30, %c20] : memref<1x4x512xf32, #tpu.memory_space<vmem>>, vector<1x4x384xf32>
    %32 = vector.shape_cast %31 : vector<1x4x384xf32> to vector<4x384xf32>
    %cst_31 = arith.constant dense<0.000000e+00> : vector<8x384xf32>
    %33 = tpu.matmul %30, %32, %cst_31 {dimension_numbers = #tpu.dot_dimension_numbers<[1], [0], [0], [1], [0, 0, 1, 1], [], []>} : vector<8x4xf32>, vector<4x384xf32>, vector<8x384xf32> -> vector<8x384xf32>
    %34 = arith.addf %28, %33 : vector<8x384xf32>
    %c6 = arith.constant 6 : index
    %c0_32 = arith.constant 0 : index
    %c0_33 = arith.constant 0 : index
    %35 = vector.load %arg3[%c6, %c0_32, %c0_33] : memref<9x8x4xf32, #tpu.memory_space<vmem>>, vector<1x8x4xf32>
    %36 = vector.shape_cast %35 : vector<1x8x4xf32> to vector<8x4xf32>
    %c0_34 = arith.constant 0 : index
    %c0_35 = arith.constant 0 : index
    %c36 = arith.constant 36 : index
    %37 = vector.load %arg2[%c0_34, %c0_35, %c36] : memref<1x4x512xf32, #tpu.memory_space<vmem>>, vector<1x4x384xf32>
    %38 = vector.shape_cast %37 : vector<1x4x384xf32> to vector<4x384xf32>
    %cst_36 = arith.constant dense<0.000000e+00> : vector<8x384xf32>
    %39 = tpu.matmul %36, %38, %cst_36 {dimension_numbers = #tpu.dot_dimension_numbers<[1], [0], [0], [1], [0, 0, 1, 1], [], []>} : vector<8x4xf32>, vector<4x384xf32>, vector<8x384xf32> -> vector<8x384xf32>
    %40 = arith.addf %34, %39 : vector<8x384xf32>
    %c7 = arith.constant 7 : index
    %c0_37 = arith.constant 0 : index
    %c0_38 = arith.constant 0 : index
    %41 = vector.load %arg3[%c7, %c0_37, %c0_38] : memref<9x8x4xf32, #tpu.memory_space<vmem>>, vector<1x8x4xf32>
    %42 = vector.shape_cast %41 : vector<1x8x4xf32> to vector<8x4xf32>
    %c0_39 = arith.constant 0 : index
    %c0_40 = arith.constant 0 : index
    %c37 = arith.constant 37 : index
    %43 = vector.load %arg2[%c0_39, %c0_40, %c37] : memref<1x4x512xf32, #tpu.memory_space<vmem>>, vector<1x4x384xf32>
    %44 = vector.shape_cast %43 : vector<1x4x384xf32> to vector<4x384xf32>
    %cst_41 = arith.constant dense<0.000000e+00> : vector<8x384xf32>
    %45 = tpu.matmul %42, %44, %cst_41 {dimension_numbers = #tpu.dot_dimension_numbers<[1], [0], [0], [1], [0, 0, 1, 1], [], []>} : vector<8x4xf32>, vector<4x384xf32>, vector<8x384xf32> -> vector<8x384xf32>
    %46 = arith.addf %40, %45 : vector<8x384xf32>
    %c8 = arith.constant 8 : index
    %c0_42 = arith.constant 0 : index
    %c0_43 = arith.constant 0 : index
    %47 = vector.load %arg3[%c8, %c0_42, %c0_43] : memref<9x8x4xf32, #tpu.memory_space<vmem>>, vector<1x8x4xf32>
    %48 = vector.shape_cast %47 : vector<1x8x4xf32> to vector<8x4xf32>
    %c0_44 = arith.constant 0 : index
    %c0_45 = arith.constant 0 : index
    %c38 = arith.constant 38 : index
    %49 = vector.load %arg2[%c0_44, %c0_45, %c38] : memref<1x4x512xf32, #tpu.memory_space<vmem>>, vector<1x4x384xf32>
    %50 = vector.shape_cast %49 : vector<1x4x384xf32> to vector<4x384xf32>
    %cst_46 = arith.constant dense<0.000000e+00> : vector<8x384xf32>
    %51 = tpu.matmul %48, %50, %cst_46 {dimension_numbers = #tpu.dot_dimension_numbers<[1], [0], [0], [1], [0, 0, 1, 1], [], []>} : vector<8x4xf32>, vector<4x384xf32>, vector<8x384xf32> -> vector<8x384xf32>
    %52 = arith.addf %46, %51 : vector<8x384xf32>
    %c0_47 = arith.constant 0 : index
    %c0_48 = arith.constant 0 : index
    %53 = vector.load %arg4[%c0_47, %c0_48] : memref<8x1xf32, #tpu.memory_space<vmem>>, vector<8x1xf32>
    %54 = vector.broadcast %53 : vector<8x1xf32> to vector<8x384xf32>
    %55 = arith.addf %52, %54 : vector<8x384xf32>
    %cst_49 = arith.constant 0.000000e+00 : f32
    %56 = vector.broadcast %cst_49 : f32 to vector<8x384xf32>
    %57 = arith.maximumf %55, %56 : vector<8x384xf32>
    %c0_50 = arith.constant 0 : index
    %c0_51 = arith.constant 0 : index
    %58 = vector.load %arg5[%c0_50, %c0_51] : memref<8x4xf32, #tpu.memory_space<vmem>>, vector<8x4xf32>
    %c0_52 = arith.constant 0 : index
    %c0_53 = arith.constant 0 : index
    %c19_54 = arith.constant 19 : index
    %59 = vector.load %arg2[%c0_52, %c0_53, %c19_54] : memref<1x4x512xf32, #tpu.memory_space<vmem>>, vector<1x4x384xf32>
    %60 = vector.shape_cast %59 : vector<1x4x384xf32> to vector<4x384xf32>
    %cst_55 = arith.constant dense<0.000000e+00> : vector<8x384xf32>
    %61 = tpu.matmul %58, %60, %cst_55 {dimension_numbers = #tpu.dot_dimension_numbers<[1], [0], [0], [1], [0, 0, 1, 1], [], []>} : vector<8x4xf32>, vector<4x384xf32>, vector<8x384xf32> -> vector<8x384xf32>
    %c0_56 = arith.constant 0 : index
    %c0_57 = arith.constant 0 : index
    %62 = vector.load %arg6[%c0_56, %c0_57] : memref<8x1xf32, #tpu.memory_space<vmem>>, vector<8x1xf32>
    %63 = vector.broadcast %62 : vector<8x1xf32> to vector<8x384xf32>
    %64 = arith.addf %61, %63 : vector<8x384xf32>
    %65 = arith.addf %57, %64 : vector<8x384xf32>
    %c0_58 = arith.constant 0 : index
    %c0_59 = arith.constant 0 : index
    %c0_60 = arith.constant 0 : index
    %66 = vector.load %arg7[%c0_58, %c0_59, %c0_60] : memref<1x8x384xf32, #tpu.memory_space<vmem>>, vector<1x8x384xf32>
    %67 = vector.shape_cast %66 : vector<1x8x384xf32> to vector<8x384xf32>
    %68 = vector.shape_cast %65 : vector<8x384xf32> to vector<1x8x384xf32>
    tpu.vector_store %arg7[%c0_58, %c0_59, %c0_60], %68 {strides = array<i32>} : memref<1x8x384xf32, #tpu.memory_space<vmem>>, vector<1x8x384xf32>,
    return
  }
  func.func @transform_0(%arg0: i32, %arg1: i32) -> (i32, i32, i32) {
    %c0_i32 = arith.constant 0 : i32
    %c0_i32_0 = arith.constant 0 : i32
    %c0_i32_1 = arith.constant 0 : i32
    return %arg0, %c0_i32, %c0_i32_0 : i32, i32, i32
  }
  func.func @transform_1(%arg0: i32, %arg1: i32) -> (i32, i32, i32) {
    %c0_i32 = arith.constant 0 : i32
    %c0_i32_0 = arith.constant 0 : i32
    %c0_i32_1 = arith.constant 0 : i32
    return %c0_i32, %arg1, %c0_i32_0 : i32, i32, i32
  }
  func.func @transform_2(%arg0: i32, %arg1: i32) -> (i32, i32) {
    %c0_i32 = arith.constant 0 : i32
    %c0_i32_0 = arith.constant 0 : i32
    return %arg1, %c0_i32 : i32, i32
  }
  func.func @transform_3(%arg0: i32, %arg1: i32) -> (i32, i32) {
    %c0_i32 = arith.constant 0 : i32
    %c0_i32_0 = arith.constant 0 : i32
    return %arg1, %c0_i32 : i32, i32
  }
  func.func @transform_4(%arg0: i32, %arg1: i32) -> (i32, i32) {
    %c0_i32 = arith.constant 0 : i32
    %c0_i32_0 = arith.constant 0 : i32
    return %arg1, %c0_i32 : i32, i32
  }
  func.func @transform_5(%arg0: i32, %arg1: i32) -> (i32, i32, i32) {
    %c0_i32 = arith.constant 0 : i32
    %c0_i32_0 = arith.constant 0 : i32
    return %arg0, %arg1, %c0_i32 : i32, i32, i32
  }
}

</mosaic_0001>

<llo_original>
// kernel: tpu_custom_call.1
$region0: #{tpu_custom_call.1}
  #allocation0 [shape = 'u32[]', space=smem, size = 0x4, offset = 0x4, fixed_abs, tag = 'smem constant byte address 0x4 - core index']
  #allocation1 [shape = 'u32[72,128]{1,0:T(1,128)}', space=vmem, size = 0x9000, scoped, tag = 'internal scratch']
  %s0 = inlined_call_operand.vmem [shape: f32[2,4,512], index: 0, kind: input, shape index: {}]
  %s1 = inlined_call_operand.vmem [shape: f32[9,8,4], index: 1, kind: input, shape index: {}]
  %s2 = inlined_call_operand.vmem [shape: f32[8,1], index: 2, kind: input, shape index: {}]
  %s3 = inlined_call_operand.vmem [shape: f32[8,4], index: 3, kind: input, shape index: {}]
  %s4 = inlined_call_operand.vmem [shape: f32[8,1], index: 4, kind: input, shape index: {}]
  %s5 = inlined_call_operand.hbm [shape: f32[2,8,384], index: 5, kind: output, shape index: {}]
  %s6 = sld [smem:[#allocation0]]
  $region53: #{tpu_custom_call.1} parent=0
    _
  %s8 = ssub.s32 1, %s6
  %s9 = scalar_select 0, %s8, %s6
  $region1: #{tpu_custom_call.1} parent=0
    #allocation2 [shape = 'u8[24576]{0}', space=vmem, size = 0x6000, scoped, tag = 'output window, operand 0']
    #allocation3 [shape = 's32[2]{0}', space=sflag, size = 0x8, scoped, tag = 'scoped memory for tpu_custom_call.1']
    %10 = vsyncpa [#allocation3], 0
    %s11 = scalar_lea.sflag [#allocation3], 1
    %12 = vsyncpa %s11, 0
    loop: start=0, step=1, limit=4
    $region2: #{tpu_custom_call.1} parent=1 // loop_pre_header
      _
    $region3: #{tpu_custom_call.1} parent=1 // loop_header
      %s14 = sphi 0, %s18
      %p15 = scmp.ge.s32.totalorder %s14, 4
      %s21 = sphi 0, %s33
      %s22 = sphi 0, %s29
      %s23 = sphi 0, %s21
      %s24 = sphi 0, %s22
      %s25 = sphi 0, %s23
      %s26 = sphi 0, %s24
      %s36 = sphi 0, %s38
      %s39 = sphi 0, %s36
      %s40 = sphi 0, %s39
      %s56 = sphi 0, %s40
      %s62 = sphi 0, %s64
      %s65 = sphi 0, %s62
      %s66 = sphi 0, %s65
      %s82 = sphi 0, %s66
      %s88 = sphi 0, %s90
      %s91 = sphi 0, %s88
      %s92 = sphi 0, %s91
      %s108 = sphi 0, %s92
      %s114 = sphi 0, %s116
      %s117 = sphi 0, %s114
      %s118 = sphi 0, %s117
      %s134 = sphi 0, %s118
      %s140 = sphi 0, %s142
      %s143 = sphi 0, %s140
      %s144 = sphi 0, %s143
      %s160 = sphi 0, %s144
      %s168 = sphi 0, %s170
      %s171 = sphi 0, %s168
      %s172 = sphi 0, %s171
      %s188 = sphi 0, %s172
    $region4: #{tpu_custom_call.1} parent=1 // loop_header_branch
      %17 = sbr.rel (%p15) target = $region8
    $region5: #{tpu_custom_call.1} parent=1 // loop_body
      %s19 = ssub.s32 %s14, 1
      %s20 = ssub.s32 %s14, 2
      %s27 = sadd.s32 1, %s22
      %p28 = scmp.ge.s32.totalorder %s27, 1
      %s29 = scalar_select %p28, 0, %s27
      %s30 = sadd.s32 1, %s21
      %s31 = scalar_select %p28, %s30, %s21
      %p32 = scmp.ge.s32.totalorder %s31, 2
      %s33 = scalar_select %p32, 0, %s31
      %s34 = ssub.s32 %s21, %s33
      %p35 = scmp.eq.s32.totalorder %s34, 0
      %s37 = sadd.s32 %s36, 1
      %s38 = scalar_select %p35, %s36, %s37
      %p41 = pneg %p35
      %p42 = scmp.eq.s32.totalorder %s14, 1
      %p43 = por %p41, %p42
      %p44 = scmp.ne.s32.totalorder %s36, %s39
      %p45 = scmp.eq.s32.totalorder %s14, 0
      %p46 = por %p44, %p45
      %p47 = scmp.ne.s32.totalorder %s36, %s39
      %p48 = scmp.eq.s32.totalorder %s19, 1
      %p49 = por %p47, %p48
      %p50 = scmp.ne.s32.totalorder %s39, %s40
      %p51 = scmp.eq.s32.totalorder %s19, 0
      %p52 = por %p50, %p51
      %p53 = scmp.ne.s32.totalorder %s39, %s40
      %p54 = scmp.eq.s32.totalorder %s20, 1
      %p55 = por %p53, %p54
      %p57 = scmp.ne.s32.totalorder %s40, %s56
      %p58 = scmp.eq.s32.totalorder %s20, 0
      %p59 = por %p57, %p58
      %s60 = ssub.s32 %s22, %s29
      %p61 = scmp.eq.s32.totalorder %s60, 0
      %s63 = sadd.s32 %s62, 1
      %s64 = scalar_select %p61, %s62, %s63
      %p67 = pneg %p61
      %p68 = scmp.eq.s32.totalorder %s14, 1
      %p69 = por %p67, %p68
      %p70 = scmp.ne.s32.totalorder %s62, %s65
      %p71 = scmp.eq.s32.totalorder %s14, 0
      %p72 = por %p70, %p71
      %p73 = scmp.ne.s32.totalorder %s62, %s65
      %p74 = scmp.eq.s32.totalorder %s19, 1
      %p75 = por %p73, %p74
      %p76 = scmp.ne.s32.totalorder %s65, %s66
      %p77 = scmp.eq.s32.totalorder %s19, 0
      %p78 = por %p76, %p77
      %p79 = scmp.ne.s32.totalorder %s65, %s66
      %p80 = scmp.eq.s32.totalorder %s20, 1
      %p81 = por %p79, %p80
      %p83 = scmp.ne.s32.totalorder %s66, %s82
      %p84 = scmp.eq.s32.totalorder %s20, 0
      %p85 = por %p83, %p84
      %s86 = ssub.s32 %s22, %s29
      %p87 = scmp.eq.s32.totalorder %s86, 0
      %s89 = sadd.s32 %s88, 1
      %s90 = scalar_select %p87, %s88, %s89
      %p93 = pneg %p87
      %p94 = scmp.eq.s32.totalorder %s14, 1
      %p95 = por %p93, %p94
      %p96 = scmp.ne.s32.totalorder %s88, %s91
      %p97 = scmp.eq.s32.totalorder %s14, 0
      %p98 = por %p96, %p97
      %p99 = scmp.ne.s32.totalorder %s88, %s91
      %p100 = scmp.eq.s32.totalorder %s19, 1
      %p101 = por %p99, %p100
      %p102 = scmp.ne.s32.totalorder %s91, %s92
      %p103 = scmp.eq.s32.totalorder %s19, 0
      %p104 = por %p102, %p103
      %p105 = scmp.ne.s32.totalorder %s91, %s92
      %p106 = scmp.eq.s32.totalorder %s20, 1
      %p107 = por %p105, %p106
      %p109 = scmp.ne.s32.totalorder %s92, %s108
      %p110 = scmp.eq.s32.totalorder %s20, 0
      %p111 = por %p109, %p110
      %s112 = ssub.s32 %s22, %s29
      %p113 = scmp.eq.s32.totalorder %s112, 0
      %s115 = sadd.s32 %s114, 1
      %s116 = scalar_select %p113, %s114, %s115
      %p119 = pneg %p113
      %p120 = scmp.eq.s32.totalorder %s14, 1
      %p121 = por %p119, %p120
      %p122 = scmp.ne.s32.totalorder %s114, %s117
      %p123 = scmp.eq.s32.totalorder %s14, 0
      %p124 = por %p122, %p123
      %p125 = scmp.ne.s32.totalorder %s114, %s117
      %p126 = scmp.eq.s32.totalorder %s19, 1
      %p127 = por %p125, %p126
      %p128 = scmp.ne.s32.totalorder %s117, %s118
      %p129 = scmp.eq.s32.totalorder %s19, 0
      %p130 = por %p128, %p129
      %p131 = scmp.ne.s32.totalorder %s117, %s118
      %p132 = scmp.eq.s32.totalorder %s20, 1
      %p133 = por %p131, %p132
      %p135 = scmp.ne.s32.totalorder %s118, %s134
      %p136 = scmp.eq.s32.totalorder %s20, 0
      %p137 = por %p135, %p136
      %s138 = ssub.s32 %s22, %s29
      %p139 = scmp.eq.s32.totalorder %s138, 0
      %s141 = sadd.s32 %s140, 1
      %s142 = scalar_select %p139, %s140, %s141
      %p145 = pneg %p139
      %p146 = scmp.eq.s32.totalorder %s14, 1
      %p147 = por %p145, %p146
      %p148 = scmp.ne.s32.totalorder %s140, %s143
      %p149 = scmp.eq.s32.totalorder %s14, 0
      %p150 = por %p148, %p149
      %p151 = scmp.ne.s32.totalorder %s140, %s143
      %p152 = scmp.eq.s32.totalorder %s19, 1
      %p153 = por %p151, %p152
      %p154 = scmp.ne.s32.totalorder %s143, %s144
      %p155 = scmp.eq.s32.totalorder %s19, 0
      %p156 = por %p154, %p155
      %p157 = scmp.ne.s32.totalorder %s143, %s144
      %p158 = scmp.eq.s32.totalorder %s20, 1
      %p159 = por %p157, %p158
      %p161 = scmp.ne.s32.totalorder %s144, %s160
      %p162 = scmp.eq.s32.totalorder %s20, 0
      %p163 = por %p161, %p162
      %s164 = ssub.s32 %s21, %s33
      %s165 = ssub.s32 %s22, %s29
      %s166 = sor.u32 %s164, %s165
      %p167 = scmp.eq.s32.totalorder %s166, 0
      %s169 = sadd.s32 %s168, 1
      %s170 = scalar_select %p167, %s168, %s169
      %p173 = pneg %p167
      %p174 = scmp.eq.s32.totalorder %s14, 1
      %p175 = por %p173, %p174
      %p176 = scmp.ne.s32.totalorder %s168, %s171
      %p177 = scmp.eq.s32.totalorder %s14, 0
      %p178 = por %p176, %p177
      %p179 = scmp.ne.s32.totalorder %s168, %s171
      %p180 = scmp.eq.s32.totalorder %s19, 1
      %p181 = por %p179, %p180
      %p182 = scmp.ne.s32.totalorder %s171, %s172
      %p183 = scmp.eq.s32.totalorder %s19, 0
      %p184 = por %p182, %p183
      %p185 = scmp.ne.s32.totalorder %s171, %s172
      %p186 = scmp.eq.s32.totalorder %s20, 1
      %p187 = por %p185, %p186
      %p189 = scmp.ne.s32.totalorder %s172, %s188
      %p190 = scmp.eq.s32.totalorder %s20, 0
      %p191 = por %p189, %p190
      %p192 = scmp.le.s32.totalorder 1, %s14
      %p193 = scmp.lt.s32.totalorder %s14, 3
      %p194 = pnand %p192, %p193
      %p195 = pneg %p194
      // Predicated region
      $region9: #{tpu_custom_call.1} parent=5 // pred_check
        _
      $region10: #{tpu_custom_call.1} parent=5 // pred_check_branch
        %197 = sbr.rel (%p194) target = $region12
      $region11: #{tpu_custom_call.1} parent=5 // pred_region
        %s198 = ssub.s32 %s14, 1
        // Predicated region
        $region13: #{tpu_custom_call.1} parent=11 // pred_check
          %p199 = pneg %p78
        $region14: #{tpu_custom_call.1} parent=11 // pred_check_branch
          %201 = sbr.rel (%p199) target = $region16
        $region15: #{tpu_custom_call.1} parent=11 // pred_region
          %p202 = scmp.lt.s32.totalorder %s24, 0
          %s203 = scalar_select %p202, %s24, 0
          %s204 = smul.addr %s203, 8
          %s205 = scalar_lea.vmem %s1, %s204
        $region16: #{tpu_custom_call.1} parent=11 // pred_fallthru
          _
        // Predicated region
        $region17: #{tpu_custom_call.1} parent=11 // pred_check
          %p206 = pneg %p104
        $region18: #{tpu_custom_call.1} parent=11 // pred_check_branch
          %208 = sbr.rel (%p206) target = $region20
        $region19: #{tpu_custom_call.1} parent=11 // pred_region
          %p209 = scmp.lt.s32.totalorder %s24, 0
          %s210 = scalar_select %p209, %s24, 0
          %s211 = smul.addr %s210, 8
          %s212 = scalar_lea.vmem %s2, %s211
        $region20: #{tpu_custom_call.1} parent=11 // pred_fallthru
          _
        // Predicated region
        $region21: #{tpu_custom_call.1} parent=11 // pred_check
          %p213 = pneg %p130
        $region22: #{tpu_custom_call.1} parent=11 // pred_check_branch
          %215 = sbr.rel (%p213) target = $region24
        $region23: #{tpu_custom_call.1} parent=11 // pred_region
          %p216 = scmp.lt.s32.totalorder %s24, 0
          %s217 = scalar_select %p216, %s24, 0
          %s218 = smul.addr %s217, 8
          %s219 = scalar_lea.vmem %s3, %s218
        $region24: #{tpu_custom_call.1} parent=11 // pred_fallthru
          _
        // Predicated region
        $region25: #{tpu_custom_call.1} parent=11 // pred_check
          %p220 = pneg %p156
        $region26: #{tpu_custom_call.1} parent=11 // pred_check_branch
          %222 = sbr.rel (%p220) target = $region28
        $region27: #{tpu_custom_call.1} parent=11 // pred_region
          %p223 = scmp.lt.s32.totalorder %s24, 0
          %s224 = scalar_select %p223, %s24, 0
          %s225 = smul.addr %s224, 8
          %s226 = scalar_lea.vmem %s4, %s225
        $region28: #{tpu_custom_call.1} parent=11 // pred_fallthru
          _
      $region12: #{tpu_custom_call.1} parent=5 // pred_fallthru
        _
      %p227 = scmp.lt.s32.totalorder %s14, 2
      // Predicated region
      $region29: #{tpu_custom_call.1} parent=5 // pred_check
        %p228 = pneg %p227
      $region30: #{tpu_custom_call.1} parent=5 // pred_check_branch
        %230 = sbr.rel (%p228) target = $region32
      $region31: #{tpu_custom_call.1} parent=5 // pred_region
        // Predicated region
        $region33: #{tpu_custom_call.1} parent=31 // pred_check
          %p231 = pneg %p46
        $region34: #{tpu_custom_call.1} parent=31 // pred_check_branch
          %233 = sbr.rel (%p231) target = $region36
        $region35: #{tpu_custom_call.1} parent=31 // pred_region
          %p234 = scmp.lt.s32.totalorder %s21, 1
          %s235 = scalar_select %p234, %s21, 1
          %s236 = smul.addr %s235, 4
          %s237 = smul.addr %s236, 4
          %s238 = scalar_lea.vmem %s0, %s237
        $region36: #{tpu_custom_call.1} parent=31 // pred_fallthru
          _
      $region32: #{tpu_custom_call.1} parent=5 // pred_fallthru
        _
      %p239 = scmp.le.s32.totalorder 1, %s14
      %p240 = scmp.lt.s32.totalorder %s14, 3
      %p241 = pnand %p239, %p240
      %p242 = pneg %p241
      // Predicated region
      $region37: #{tpu_custom_call.1} parent=5 // pred_check
        _
      $region38: #{tpu_custom_call.1} parent=5 // pred_check_branch
        %244 = sbr.rel (%p241) target = $region40
      $region39: #{tpu_custom_call.1} parent=5 // pred_region
        %s245 = ssub.s32 %s14, 1
        %p246 = scmp.lt.s32.totalorder %s23, 1
        %s247 = scalar_select %p246, %s23, 1
        %s248 = smul.addr %s247, 4
        %s249 = smul.addr %s248, 4
        %s250 = scalar_lea.vmem %s0, %s249
        %p251 = pneg %p52
        %p252 = pneg %p49
        %p253 = scmp.lt.s32.totalorder %s24, 0
        %s254 = scalar_select %p253, %s24, 0
        %s255 = smul.addr %s254, 8
        %s256 = scalar_lea.vmem %s1, %s255
        %p257 = pneg %p78
        %p258 = pneg %p75
        %p259 = scmp.lt.s32.totalorder %s24, 0
        %s260 = scalar_select %p259, %s24, 0
        %s261 = smul.addr %s260, 8
        %s262 = scalar_lea.vmem %s2, %s261
        %p263 = pneg %p104
        %p264 = pneg %p101
        %p265 = scmp.lt.s32.totalorder %s24, 0
        %s266 = scalar_select %p265, %s24, 0
        %s267 = smul.addr %s266, 8
        %s268 = scalar_lea.vmem %s3, %s267
        %p269 = pneg %p130
        %p270 = pneg %p127
        %p271 = scmp.lt.s32.totalorder %s24, 0
        %s272 = scalar_select %p271, %s24, 0
        %s273 = smul.addr %s272, 8
        %s274 = scalar_lea.vmem %s4, %s273
        %p275 = pneg %p156
        %p276 = pneg %p153
        %p277 = pneg %p184
        %p278 = pneg %p181
        %s279 = sand.u32 %s171, 1
        %s280 = scalar_lea.sflag [#allocation3], %s279
        %s281 = sand.u32 %s171, 1
        %s282 = smul.addr %s281, 24
        %s283 = scalar_lea.vmem [#allocation2], %s282
        %p284 = scmp.lt.s32.totalorder %s23, 1
        %s285 = scalar_select %p284, %s23, 1
        %s286 = smul.addr %s285, 4
        %s287 = smul.addr %s286, 4
        %s288 = scalar_lea.vmem %s0, %s287
        %p289 = scmp.lt.s32.totalorder %s24, 0
        %s290 = scalar_select %p289, %s24, 0
        %s291 = smul.addr %s290, 8
        %s292 = scalar_lea.vmem %s1, %s291
        %p293 = scmp.lt.s32.totalorder %s24, 0
        %s294 = scalar_select %p293, %s24, 0
        %s295 = smul.addr %s294, 8
        %s296 = scalar_lea.vmem %s2, %s295
        %p297 = scmp.lt.s32.totalorder %s24, 0
        %s298 = scalar_select %p297, %s24, 0
        %s299 = smul.addr %s298, 8
        %s300 = scalar_lea.vmem %s3, %s299
        %p301 = scmp.lt.s32.totalorder %s24, 0
        %s302 = scalar_select %p301, %s24, 0
        %s303 = smul.addr %s302, 8
        %s304 = scalar_lea.vmem %s4, %s303
        %v305 = vld [vmem:[%s292] sm:$0xff]
        %v306 = vld [vmem:[%s288] sm:$0xff]
        %v307 = vld [vmem:[%s288 + $0x8] sm:$0xf]
        %s308 = scalar_lea.vmem %s292, 8
        %v309 = vld [vmem:[%s308] sm:$0xff]
        %v310 = vld [vmem:[%s288] sm:$0xff]
        %v311 = vld [vmem:[%s288 + $0x8] sm:$0xff]
        %314 = vst [vmem:[#allocation1] ss:$2 sm:$0xff] %v310
        %s315 = scalar_lea.vmem [#allocation1], 16
        %316 = vst [vmem:[%s315] ss:$2 sm:$0xff] %v311
        %v317 = vld.sshfl [vmem:[#allocation1] sm:$0xff pattern:$0x75316420]
        %v318 = vld.sshfl [vmem:[#allocation1 + $0x8] sm:$0xff pattern:$0x75316420]
        %v319 = vld.sshfl [vmem:[#allocation1 + $0x10] sm:$0xff pattern:$0x75316420]
        %v320 = vld.sshfl [vmem:[#allocation1 + $0x18] sm:$0xff pattern:$0x75316420]
        %321 = vrot.lane.b32.xlu0 %v317, 127
        %v322 = vpop.permute.xlu0 %321
        %323 = vrot.lane.b32.xlu0 %v318, 127
        %v324 = vpop.permute.xlu0 %323
        %325 = vrot.lane.b32.xlu0 %v319, 127
        %v326 = vpop.permute.xlu0 %325
        %327 = vrot.lane.b32.xlu0 %v320, 127
        %v328 = vpop.permute.xlu0 %327
        %vm329 = vcmask 1039360
        %v330 = vsel %vm329, %v322, %v324
        %v331 = vsel %vm329, %v324, %v326
        %v332 = vsel %vm329, %v326, %v328
        %vm333 = vcmask 31744
        %v335 = vsel %vm333, %v309, 0
        %vm337 = vcmask 1043456
        %v338 = vsel %vm337, %v330, 0
        %v340 = vsel %vm337, %v331, 0
        %v342 = vsel %vm337, %v332, 0
        %344 = vmatpush.msra.mxu0 0.0
        %345 = vmatpush.msra.mxu0 0.0
        %346 = vmatpush.msra.mxu0 0.0
        %347 = vmatpush.msra.mxu0 0.0
        %348 = vmatpush.msra.mxu0 0.0
        %349 = vmatpush.msra.mxu0 0.0
        %350 = vmatpush.msra.mxu0 0.0
        %351 = vmatpush.msra.mxu0 0.0
        %352 = vmatpush.msra.mxu0 0.0
        %353 = vmatpush.msra.mxu0 0.0
        %354 = vmatpush.msra.mxu0 0.0
        %355 = vmatpush.msra.mxu0 0.0
        %356 = vmatpush.msra.mxu0 0.0
        %357 = vmatpush.msra.mxu0 0.0
        %358 = vmatpush.msra.mxu0 0.0
        %359 = vmatpush.msra.mxu0 %v338
        %360 = vmatmul.f32.gmra.mxu0 %v335
        %v361 = vpop.f32.mrf.mxu0
        %v362 = vadd.f32 0.0, %v361
        %363 = vdwg.mxu0
        %364 = vmatpush.msra.mxu0 0.0
        %365 = vmatpush.msra.mxu0 0.0
        %366 = vmatpush.msra.mxu0 0.0
        %367 = vmatpush.msra.mxu0 0.0
        %368 = vmatpush.msra.mxu0 0.0
        %369 = vmatpush.msra.mxu0 0.0
        %370 = vmatpush.msra.mxu0 0.0
        %371 = vmatpush.msra.mxu0 0.0
        %372 = vmatpush.msra.mxu0 0.0
        %373 = vmatpush.msra.mxu0 0.0
        %374 = vmatpush.msra.mxu0 0.0
        %375 = vmatpush.msra.mxu0 0.0
        %376 = vmatpush.msra.mxu0 0.0
        %377 = vmatpush.msra.mxu0 0.0
        %378 = vmatpush.msra.mxu0 0.0
        %379 = vmatpush.msra.mxu0 %v340
        %380 = vmatmul.f32.gmra.mxu0 %v335
        %v381 = vpop.f32.mrf.mxu0
        %v382 = vadd.f32 0.0, %v381
        %383 = vdwg.mxu0
        %384 = vmatpush.msra.mxu0 0.0
        %385 = vmatpush.msra.mxu0 0.0
        %386 = vmatpush.msra.mxu0 0.0
        %387 = vmatpush.msra.mxu0 0.0
        %388 = vmatpush.msra.mxu0 0.0
        %389 = vmatpush.msra.mxu0 0.0
        %390 = vmatpush.msra.mxu0 0.0
        %391 = vmatpush.msra.mxu0 0.0
        %392 = vmatpush.msra.mxu0 0.0
        %393 = vmatpush.msra.mxu0 0.0
        %394 = vmatpush.msra.mxu0 0.0
        %395 = vmatpush.msra.mxu0 0.0
        %396 = vmatpush.msra.mxu0 0.0
        %397 = vmatpush.msra.mxu0 0.0
        %398 = vmatpush.msra.mxu0 0.0
        %399 = vmatpush.msra.mxu0 %v342
        %400 = vmatmul.f32.gmra.mxu0 %v335
        %v401 = vpop.f32.mrf.mxu0
        %v402 = vadd.f32 0.0, %v401
        %403 = vdwg.mxu0
        %406 = vst [vmem:[#allocation1] ss:$2 sm:$0xff] %v306
        %s407 = scalar_lea.vmem [#allocation1], 16
        %408 = vst [vmem:[%s407] ss:$2 sm:$0xff] %v307
        %v409 = vld.sshfl [vmem:[#allocation1] sm:$0xff pattern:$0x75316420]
        %v410 = vld.sshfl [vmem:[#allocation1 + $0x8] sm:$0xff pattern:$0x75316420]
        %v411 = vld.sshfl [vmem:[#allocation1 + $0x10] sm:$0xff pattern:$0x75316420]
        %v413 = vsel %vm333, %v305, 0
        %v415 = vsel %vm337, %v409, 0
        %v417 = vsel %vm337, %v410, 0
        %v419 = vsel %vm337, %v411, 0
        %421 = vmatpush.msra.mxu0 0.0
        %422 = vmatpush.msra.mxu0 0.0
        %423 = vmatpush.msra.mxu0 0.0
        %424 = vmatpush.msra.mxu0 0.0
        %425 = vmatpush.msra.mxu0 0.0
        %426 = vmatpush.msra.mxu0 0.0
        %427 = vmatpush.msra.mxu0 0.0
        %428 = vmatpush.msra.mxu0 0.0
        %429 = vmatpush.msra.mxu0 0.0
        %430 = vmatpush.msra.mxu0 0.0
        %431 = vmatpush.msra.mxu0 0.0
        %432 = vmatpush.msra.mxu0 0.0
        %433 = vmatpush.msra.mxu0 0.0
        %434 = vmatpush.msra.mxu0 0.0
        %435 = vmatpush.msra.mxu0 0.0
        %436 = vmatpush.msra.mxu0 %v415
        %437 = vmatmul.f32.gmra.mxu0 %v413
        %v438 = vpop.f32.mrf.mxu0
        %v439 = vadd.f32 %v362, %v438
        %440 = vdwg.mxu0
        %441 = vmatpush.msra.mxu0 0.0
        %442 = vmatpush.msra.mxu0 0.0
        %443 = vmatpush.msra.mxu0 0.0
        %444 = vmatpush.msra.mxu0 0.0
        %445 = vmatpush.msra.mxu0 0.0
        %446 = vmatpush.msra.mxu0 0.0
        %447 = vmatpush.msra.mxu0 0.0
        %448 = vmatpush.msra.mxu0 0.0
        %449 = vmatpush.msra.mxu0 0.0
        %450 = vmatpush.msra.mxu0 0.0
        %451 = vmatpush.msra.mxu0 0.0
        %452 = vmatpush.msra.mxu0 0.0
        %453 = vmatpush.msra.mxu0 0.0
        %454 = vmatpush.msra.mxu0 0.0
        %455 = vmatpush.msra.mxu0 0.0
        %456 = vmatpush.msra.mxu0 %v417
        %457 = vmatmul.f32.gmra.mxu0 %v413
        %v458 = vpop.f32.mrf.mxu0
        %v459 = vadd.f32 %v382, %v458
        %460 = vdwg.mxu0
        %461 = vmatpush.msra.mxu0 0.0
        %462 = vmatpush.msra.mxu0 0.0
        %463 = vmatpush.msra.mxu0 0.0
        %464 = vmatpush.msra.mxu0 0.0
        %465 = vmatpush.msra.mxu0 0.0
        %466 = vmatpush.msra.mxu0 0.0
        %467 = vmatpush.msra.mxu0 0.0
        %468 = vmatpush.msra.mxu0 0.0
        %469 = vmatpush.msra.mxu0 0.0
        %470 = vmatpush.msra.mxu0 0.0
        %471 = vmatpush.msra.mxu0 0.0
        %472 = vmatpush.msra.mxu0 0.0
        %473 = vmatpush.msra.mxu0 0.0
        %474 = vmatpush.msra.mxu0 0.0
        %475 = vmatpush.msra.mxu0 0.0
        %476 = vmatpush.msra.mxu0 %v419
        %477 = vmatmul.f32.gmra.mxu0 %v413
        %v478 = vpop.f32.mrf.mxu0
        %v479 = vadd.f32 %v402, %v478
        %480 = vdwg.mxu0
        %s481 = scalar_lea.vmem %s292, 16
        %v482 = vld [vmem:[%s481] sm:$0xff]
        %v483 = vld [vmem:[%s288] sm:$0xff]
        %v484 = vld [vmem:[%s288 + $0x8] sm:$0xff]
        %487 = vst [vmem:[#allocation1] ss:$2 sm:$0xff] %v483
        %s488 = scalar_lea.vmem [#allocation1], 16
        %489 = vst [vmem:[%s488] ss:$2 sm:$0xff] %v484
        %v490 = vld.sshfl [vmem:[#allocation1] sm:$0xff pattern:$0x75316420]
        %v491 = vld.sshfl [vmem:[#allocation1 + $0x8] sm:$0xff pattern:$0x75316420]
        %v492 = vld.sshfl [vmem:[#allocation1 + $0x10] sm:$0xff pattern:$0x75316420]
        %v493 = vld.sshfl [vmem:[#allocation1 + $0x18] sm:$0xff pattern:$0x75316420]
        %494 = vrot.lane.b32.xlu0 %v490, 126
        %v495 = vpop.permute.xlu0 %494
        %496 = vrot.lane.b32.xlu0 %v491, 126
        %v497 = vpop.permute.xlu0 %496
        %498 = vrot.lane.b32.xlu0 %v492, 126
        %v499 = vpop.permute.xlu0 %498
        %500 = vrot.lane.b32.xlu0 %v493, 126
        %v501 = vpop.permute.xlu0 %500
        %vm502 = vcmask 1031168
        %v503 = vsel %vm502, %v495, %v497
        %v504 = vsel %vm502, %v497, %v499
        %v505 = vsel %vm502, %v499, %v501
        %v507 = vsel %vm333, %v482, 0
        %v509 = vsel %vm337, %v503, 0
        %v511 = vsel %vm337, %v504, 0
        %v513 = vsel %vm337, %v505, 0
        %515 = vmatpush.msra.mxu0 0.0
        %516 = vmatpush.msra.mxu0 0.0
        %517 = vmatpush.msra.mxu0 0.0
        %518 = vmatpush.msra.mxu0 0.0
        %519 = vmatpush.msra.mxu0 0.0
        %520 = vmatpush.msra.mxu0 0.0
        %521 = vmatpush.msra.mxu0 0.0
        %522 = vmatpush.msra.mxu0 0.0
        %523 = vmatpush.msra.mxu0 0.0
        %524 = vmatpush.msra.mxu0 0.0
        %525 = vmatpush.msra.mxu0 0.0
        %526 = vmatpush.msra.mxu0 0.0
        %527 = vmatpush.msra.mxu0 0.0
        %528 = vmatpush.msra.mxu0 0.0
        %529 = vmatpush.msra.mxu0 0.0
        %530 = vmatpush.msra.mxu0 %v509
        %531 = vmatmul.f32.gmra.mxu0 %v507
        %v532 = vpop.f32.mrf.mxu0
        %v533 = vadd.f32 0.0, %v532
        %534 = vdwg.mxu0
        %535 = vmatpush.msra.mxu0 0.0
        %536 = vmatpush.msra.mxu0 0.0
        %537 = vmatpush.msra.mxu0 0.0
        %538 = vmatpush.msra.mxu0 0.0
        %539 = vmatpush.msra.mxu0 0.0
        %540 = vmatpush.msra.mxu0 0.0
        %541 = vmatpush.msra.mxu0 0.0
        %542 = vmatpush.msra.mxu0 0.0
        %543 = vmatpush.msra.mxu0 0.0
        %544 = vmatpush.msra.mxu0 0.0
        %545 = vmatpush.msra.mxu0 0.0
        %546 = vmatpush.msra.mxu0 0.0
        %547 = vmatpush.msra.mxu0 0.0
        %548 = vmatpush.msra.mxu0 0.0
        %549 = vmatpush.msra.mxu0 0.0
        %550 = vmatpush.msra.mxu0 %v511
        %551 = vmatmul.f32.gmra.mxu0 %v507
        %v552 = vpop.f32.mrf.mxu0
        %v553 = vadd.f32 0.0, %v552
        %554 = vdwg.mxu0
        %555 = vmatpush.msra.mxu0 0.0
        %556 = vmatpush.msra.mxu0 0.0
        %557 = vmatpush.msra.mxu0 0.0
        %558 = vmatpush.msra.mxu0 0.0
        %559 = vmatpush.msra.mxu0 0.0
        %560 = vmatpush.msra.mxu0 0.0
        %561 = vmatpush.msra.mxu0 0.0
        %562 = vmatpush.msra.mxu0 0.0
        %563 = vmatpush.msra.mxu0 0.0
        %564 = vmatpush.msra.mxu0 0.0
        %565 = vmatpush.msra.mxu0 0.0
        %566 = vmatpush.msra.mxu0 0.0
        %567 = vmatpush.msra.mxu0 0.0
        %568 = vmatpush.msra.mxu0 0.0
        %569 = vmatpush.msra.mxu0 0.0
        %570 = vmatpush.msra.mxu0 %v513
        %571 = vmatmul.f32.gmra.mxu0 %v507
        %v572 = vpop.f32.mrf.mxu0
        %v573 = vadd.f32 0.0, %v572
        %574 = vdwg.mxu0
        %v575 = vadd.f32 %v439, %v533
        %v576 = vadd.f32 %v459, %v553
        %v577 = vadd.f32 %v479, %v573
        %s578 = scalar_lea.vmem %s292, 24
        %v579 = vld [vmem:[%s578] sm:$0xff]
        %v580 = vld [vmem:[%s288] sm:$0xff]
        %v581 = vld [vmem:[%s288 + $0x8] sm:$0xff]
        %584 = vst [vmem:[#allocation1] ss:$2 sm:$0xff] %v580
        %s585 = scalar_lea.vmem [#allocation1], 16
        %586 = vst [vmem:[%s585] ss:$2 sm:$0xff] %v581
        %v587 = vld.sshfl [vmem:[#allocation1] sm:$0xff pattern:$0x75316420]
        %v588 = vld.sshfl [vmem:[#allocation1 + $0x8] sm:$0xff pattern:$0x75316420]
        %v589 = vld.sshfl [vmem:[#allocation1 + $0x10] sm:$0xff pattern:$0x75316420]
        %v590 = vld.sshfl [vmem:[#allocation1 + $0x18] sm:$0xff pattern:$0x75316420]
        %591 = vrot.lane.b32.xlu0 %v587, 110
        %v592 = vpop.permute.xlu0 %591
        %593 = vrot.lane.b32.xlu0 %v588, 110
        %v594 = vpop.permute.xlu0 %593
        %595 = vrot.lane.b32.xlu0 %v589, 110
        %v596 = vpop.permute.xlu0 %595
        %597 = vrot.lane.b32.xlu0 %v590, 110
        %v598 = vpop.permute.xlu0 %597
        %vm599 = vcmask 900096
        %v600 = vsel %vm599, %v592, %v594
        %v601 = vsel %vm599, %v594, %v596
        %v602 = vsel %vm599, %v596, %v598
        %v604 = vsel %vm333, %v579, 0
        %v606 = vsel %vm337, %v600, 0
        %v608 = vsel %vm337, %v601, 0
        %v610 = vsel %vm337, %v602, 0
        %612 = vmatpush.msra.mxu0 0.0
        %613 = vmatpush.msra.mxu0 0.0
        %614 = vmatpush.msra.mxu0 0.0
        %615 = vmatpush.msra.mxu0 0.0
        %616 = vmatpush.msra.mxu0 0.0
        %617 = vmatpush.msra.mxu0 0.0
        %618 = vmatpush.msra.mxu0 0.0
        %619 = vmatpush.msra.mxu0 0.0
        %620 = vmatpush.msra.mxu0 0.0
        %621 = vmatpush.msra.mxu0 0.0
        %622 = vmatpush.msra.mxu0 0.0
        %623 = vmatpush.msra.mxu0 0.0
        %624 = vmatpush.msra.mxu0 0.0
        %625 = vmatpush.msra.mxu0 0.0
        %626 = vmatpush.msra.mxu0 0.0
        %627 = vmatpush.msra.mxu0 %v606
        %628 = vmatmul.f32.gmra.mxu0 %v604
        %v629 = vpop.f32.mrf.mxu0
        %v630 = vadd.f32 0.0, %v629
        %631 = vdwg.mxu0
        %632 = vmatpush.msra.mxu0 0.0
        %633 = vmatpush.msra.mxu0 0.0
        %634 = vmatpush.msra.mxu0 0.0
        %635 = vmatpush.msra.mxu0 0.0
        %636 = vmatpush.msra.mxu0 0.0
        %637 = vmatpush.msra.mxu0 0.0
        %638 = vmatpush.msra.mxu0 0.0
        %639 = vmatpush.msra.mxu0 0.0
        %640 = vmatpush.msra.mxu0 0.0
        %641 = vmatpush.msra.mxu0 0.0
        %642 = vmatpush.msra.mxu0 0.0
        %643 = vmatpush.msra.mxu0 0.0
        %644 = vmatpush.msra.mxu0 0.0
        %645 = vmatpush.msra.mxu0 0.0
        %646 = vmatpush.msra.mxu0 0.0
        %647 = vmatpush.msra.mxu0 %v608
        %648 = vmatmul.f32.gmra.mxu0 %v604
        %v649 = vpop.f32.mrf.mxu0
        %v650 = vadd.f32 0.0, %v649
        %651 = vdwg.mxu0
        %652 = vmatpush.msra.mxu0 0.0
        %653 = vmatpush.msra.mxu0 0.0
        %654 = vmatpush.msra.mxu0 0.0
        %655 = vmatpush.msra.mxu0 0.0
        %656 = vmatpush.msra.mxu0 0.0
        %657 = vmatpush.msra.mxu0 0.0
        %658 = vmatpush.msra.mxu0 0.0
        %659 = vmatpush.msra.mxu0 0.0
        %660 = vmatpush.msra.mxu0 0.0
        %661 = vmatpush.msra.mxu0 0.0
        %662 = vmatpush.msra.mxu0 0.0
        %663 = vmatpush.msra.mxu0 0.0
        %664 = vmatpush.msra.mxu0 0.0
        %665 = vmatpush.msra.mxu0 0.0
        %666 = vmatpush.msra.mxu0 0.0
        %667 = vmatpush.msra.mxu0 %v610
        %668 = vmatmul.f32.gmra.mxu0 %v604
        %v669 = vpop.f32.mrf.mxu0
        %v670 = vadd.f32 0.0, %v669
        %671 = vdwg.mxu0
        %v672 = vadd.f32 %v575, %v630
        %v673 = vadd.f32 %v576, %v650
        %v674 = vadd.f32 %v577, %v670
        %s675 = scalar_lea.vmem %s292, 32
        %v676 = vld [vmem:[%s675] sm:$0xff]
        %v677 = vld [vmem:[%s288] sm:$0xff]
        %v678 = vld [vmem:[%s288 + $0x8] sm:$0xff]
        %681 = vst [vmem:[#allocation1] ss:$2 sm:$0xff] %v677
        %s682 = scalar_lea.vmem [#allocation1], 16
        %683 = vst [vmem:[%s682] ss:$2 sm:$0xff] %v678
        %v684 = vld.sshfl [vmem:[#allocation1] sm:$0xff pattern:$0x75316420]
        %v685 = vld.sshfl [vmem:[#allocation1 + $0x8] sm:$0xff pattern:$0x75316420]
        %v686 = vld.sshfl [vmem:[#allocation1 + $0x10] sm:$0xff pattern:$0x75316420]
        %v687 = vld.sshfl [vmem:[#allocation1 + $0x18] sm:$0xff pattern:$0x75316420]
        %688 = vrot.lane.b32.xlu0 %v684, 109
        %v689 = vpop.permute.xlu0 %688
        %690 = vrot.lane.b32.xlu0 %v685, 109
        %v691 = vpop.permute.xlu0 %690
        %692 = vrot.lane.b32.xlu0 %v686, 109
        %v693 = vpop.permute.xlu0 %692
        %694 = vrot.lane.b32.xlu0 %v687, 109
        %v695 = vpop.permute.xlu0 %694
        %vm696 = vcmask 891904
        %v697 = vsel %vm696, %v689, %v691
        %v698 = vsel %vm696, %v691, %v693
        %v699 = vsel %vm696, %v693, %v695
        %v701 = vsel %vm333, %v676, 0
        %v703 = vsel %vm337, %v697, 0
        %v705 = vsel %vm337, %v698, 0
        %v707 = vsel %vm337, %v699, 0
        %709 = vmatpush.msra.mxu0 0.0
        %710 = vmatpush.msra.mxu0 0.0
        %711 = vmatpush.msra.mxu0 0.0
        %712 = vmatpush.msra.mxu0 0.0
        %713 = vmatpush.msra.mxu0 0.0
        %714 = vmatpush.msra.mxu0 0.0
        %715 = vmatpush.msra.mxu0 0.0
        %716 = vmatpush.msra.mxu0 0.0
        %717 = vmatpush.msra.mxu0 0.0
        %718 = vmatpush.msra.mxu0 0.0
        %719 = vmatpush.msra.mxu0 0.0
        %720 = vmatpush.msra.mxu0 0.0
        %721 = vmatpush.msra.mxu0 0.0
        %722 = vmatpush.msra.mxu0 0.0
        %723 = vmatpush.msra.mxu0 0.0
        %724 = vmatpush.msra.mxu0 %v703
        %725 = vmatmul.f32.gmra.mxu0 %v701
        %v726 = vpop.f32.mrf.mxu0
        %v727 = vadd.f32 0.0, %v726
        %728 = vdwg.mxu0
        %729 = vmatpush.msra.mxu0 0.0
        %730 = vmatpush.msra.mxu0 0.0
        %731 = vmatpush.msra.mxu0 0.0
        %732 = vmatpush.msra.mxu0 0.0
        %733 = vmatpush.msra.mxu0 0.0
        %734 = vmatpush.msra.mxu0 0.0
        %735 = vmatpush.msra.mxu0 0.0
        %736 = vmatpush.msra.mxu0 0.0
        %737 = vmatpush.msra.mxu0 0.0
        %738 = vmatpush.msra.mxu0 0.0
        %739 = vmatpush.msra.mxu0 0.0
        %740 = vmatpush.msra.mxu0 0.0
        %741 = vmatpush.msra.mxu0 0.0
        %742 = vmatpush.msra.mxu0 0.0
        %743 = vmatpush.msra.mxu0 0.0
        %744 = vmatpush.msra.mxu0 %v705
        %745 = vmatmul.f32.gmra.mxu0 %v701
        %v746 = vpop.f32.mrf.mxu0
        %v747 = vadd.f32 0.0, %v746
        %748 = vdwg.mxu0
        %749 = vmatpush.msra.mxu0 0.0
        %750 = vmatpush.msra.mxu0 0.0
        %751 = vmatpush.msra.mxu0 0.0
        %752 = vmatpush.msra.mxu0 0.0
        %753 = vmatpush.msra.mxu0 0.0
        %754 = vmatpush.msra.mxu0 0.0
        %755 = vmatpush.msra.mxu0 0.0
        %756 = vmatpush.msra.mxu0 0.0
        %757 = vmatpush.msra.mxu0 0.0
        %758 = vmatpush.msra.mxu0 0.0
        %759 = vmatpush.msra.mxu0 0.0
        %760 = vmatpush.msra.mxu0 0.0
        %761 = vmatpush.msra.mxu0 0.0
        %762 = vmatpush.msra.mxu0 0.0
        %763 = vmatpush.msra.mxu0 0.0
        %764 = vmatpush.msra.mxu0 %v707
        %765 = vmatmul.f32.gmra.mxu0 %v701
        %v766 = vpop.f32.mrf.mxu0
        %v767 = vadd.f32 0.0, %v766
        %768 = vdwg.mxu0
        %v769 = vadd.f32 %v672, %v727
        %v770 = vadd.f32 %v673, %v747
        %v771 = vadd.f32 %v674, %v767
        %s772 = scalar_lea.vmem %s292, 40
        %v773 = vld [vmem:[%s772] sm:$0xff]
        %v774 = vld [vmem:[%s288] sm:$0xff]
        %v775 = vld [vmem:[%s288 + $0x8] sm:$0xff]
        %778 = vst [vmem:[#allocation1] ss:$2 sm:$0xff] %v774
        %s779 = scalar_lea.vmem [#allocation1], 16
        %780 = vst [vmem:[%s779] ss:$2 sm:$0xff] %v775
        %v781 = vld.sshfl [vmem:[#allocation1] sm:$0xff pattern:$0x75316420]
        %v782 = vld.sshfl [vmem:[#allocation1 + $0x8] sm:$0xff pattern:$0x75316420]
        %v783 = vld.sshfl [vmem:[#allocation1 + $0x10] sm:$0xff pattern:$0x75316420]
        %v784 = vld.sshfl [vmem:[#allocation1 + $0x18] sm:$0xff pattern:$0x75316420]
        %785 = vrot.lane.b32.xlu0 %v781, 108
        %v786 = vpop.permute.xlu0 %785
        %787 = vrot.lane.b32.xlu0 %v782, 108
        %v788 = vpop.permute.xlu0 %787
        %789 = vrot.lane.b32.xlu0 %v783, 108
        %v790 = vpop.permute.xlu0 %789
        %791 = vrot.lane.b32.xlu0 %v784, 108
        %v792 = vpop.permute.xlu0 %791
        %vm793 = vcmask 883712
        %v794 = vsel %vm793, %v786, %v788
        %v795 = vsel %vm793, %v788, %v790
        %v796 = vsel %vm793, %v790, %v792
        %v798 = vsel %vm333, %v773, 0
        %v800 = vsel %vm337, %v794, 0
        %v802 = vsel %vm337, %v795, 0
        %v804 = vsel %vm337, %v796, 0
        %806 = vmatpush.msra.mxu0 0.0
        %807 = vmatpush.msra.mxu0 0.0
        %808 = vmatpush.msra.mxu0 0.0
        %809 = vmatpush.msra.mxu0 0.0
        %810 = vmatpush.msra.mxu0 0.0
        %811 = vmatpush.msra.mxu0 0.0
        %812 = vmatpush.msra.mxu0 0.0
        %813 = vmatpush.msra.mxu0 0.0
        %814 = vmatpush.msra.mxu0 0.0
        %815 = vmatpush.msra.mxu0 0.0
        %816 = vmatpush.msra.mxu0 0.0
        %817 = vmatpush.msra.mxu0 0.0
        %818 = vmatpush.msra.mxu0 0.0
        %819 = vmatpush.msra.mxu0 0.0
        %820 = vmatpush.msra.mxu0 0.0
        %821 = vmatpush.msra.mxu0 %v800
        %822 = vmatmul.f32.gmra.mxu0 %v798
        %v823 = vpop.f32.mrf.mxu0
        %v824 = vadd.f32 0.0, %v823
        %825 = vdwg.mxu0
        %826 = vmatpush.msra.mxu0 0.0
        %827 = vmatpush.msra.mxu0 0.0
        %828 = vmatpush.msra.mxu0 0.0
        %829 = vmatpush.msra.mxu0 0.0
        %830 = vmatpush.msra.mxu0 0.0
        %831 = vmatpush.msra.mxu0 0.0
        %832 = vmatpush.msra.mxu0 0.0
        %833 = vmatpush.msra.mxu0 0.0
        %834 = vmatpush.msra.mxu0 0.0
        %835 = vmatpush.msra.mxu0 0.0
        %836 = vmatpush.msra.mxu0 0.0
        %837 = vmatpush.msra.mxu0 0.0
        %838 = vmatpush.msra.mxu0 0.0
        %839 = vmatpush.msra.mxu0 0.0
        %840 = vmatpush.msra.mxu0 0.0
        %841 = vmatpush.msra.mxu0 %v802
        %842 = vmatmul.f32.gmra.mxu0 %v798
        %v843 = vpop.f32.mrf.mxu0
        %v844 = vadd.f32 0.0, %v843
        %845 = vdwg.mxu0
        %846 = vmatpush.msra.mxu0 0.0
        %847 = vmatpush.msra.mxu0 0.0
        %848 = vmatpush.msra.mxu0 0.0
        %849 = vmatpush.msra.mxu0 0.0
        %850 = vmatpush.msra.mxu0 0.0
        %851 = vmatpush.msra.mxu0 0.0
        %852 = vmatpush.msra.mxu0 0.0
        %853 = vmatpush.msra.mxu0 0.0
        %854 = vmatpush.msra.mxu0 0.0
        %855 = vmatpush.msra.mxu0 0.0
        %856 = vmatpush.msra.mxu0 0.0
        %857 = vmatpush.msra.mxu0 0.0
        %858 = vmatpush.msra.mxu0 0.0
        %859 = vmatpush.msra.mxu0 0.0
        %860 = vmatpush.msra.mxu0 0.0
        %861 = vmatpush.msra.mxu0 %v804
        %862 = vmatmul.f32.gmra.mxu0 %v798
        %v863 = vpop.f32.mrf.mxu0
        %v864 = vadd.f32 0.0, %v863
        %865 = vdwg.mxu0
        %v866 = vadd.f32 %v769, %v824
        %v867 = vadd.f32 %v770, %v844
        %v868 = vadd.f32 %v771, %v864
        %s869 = scalar_lea.vmem %s292, 48
        %v870 = vld [vmem:[%s869] sm:$0xff]
        %v871 = vld [vmem:[%s288] sm:$0xff]
        %v872 = vld [vmem:[%s288 + $0x8] sm:$0xff]
        %875 = vst [vmem:[#allocation1] ss:$2 sm:$0xff] %v871
        %s876 = scalar_lea.vmem [#allocation1], 16
        %877 = vst [vmem:[%s876] ss:$2 sm:$0xff] %v872
        %v878 = vld.sshfl [vmem:[#allocation1] sm:$0xff pattern:$0x75316420]
        %v879 = vld.sshfl [vmem:[#allocation1 + $0x8] sm:$0xff pattern:$0x75316420]
        %v880 = vld.sshfl [vmem:[#allocation1 + $0x10] sm:$0xff pattern:$0x75316420]
        %v881 = vld.sshfl [vmem:[#allocation1 + $0x18] sm:$0xff pattern:$0x75316420]
        %882 = vrot.lane.b32.xlu0 %v878, 92
        %v883 = vpop.permute.xlu0 %882
        %884 = vrot.lane.b32.xlu0 %v879, 92
        %v885 = vpop.permute.xlu0 %884
        %886 = vrot.lane.b32.xlu0 %v880, 92
        %v887 = vpop.permute.xlu0 %886
        %888 = vrot.lane.b32.xlu0 %v881, 92
        %v889 = vpop.permute.xlu0 %888
        %vm890 = vcmask 752640
        %v891 = vsel %vm890, %v883, %v885
        %v892 = vsel %vm890, %v885, %v887
        %v893 = vsel %vm890, %v887, %v889
        %v895 = vsel %vm333, %v870, 0
        %v897 = vsel %vm337, %v891, 0
        %v899 = vsel %vm337, %v892, 0
        %v901 = vsel %vm337, %v893, 0
        %903 = vmatpush.msra.mxu0 0.0
        %904 = vmatpush.msra.mxu0 0.0
        %905 = vmatpush.msra.mxu0 0.0
        %906 = vmatpush.msra.mxu0 0.0
        %907 = vmatpush.msra.mxu0 0.0
        %908 = vmatpush.msra.mxu0 0.0
        %909 = vmatpush.msra.mxu0 0.0
        %910 = vmatpush.msra.mxu0 0.0
        %911 = vmatpush.msra.mxu0 0.0
        %912 = vmatpush.msra.mxu0 0.0
        %913 = vmatpush.msra.mxu0 0.0
        %914 = vmatpush.msra.mxu0 0.0
        %915 = vmatpush.msra.mxu0 0.0
        %916 = vmatpush.msra.mxu0 0.0
        %917 = vmatpush.msra.mxu0 0.0
        %918 = vmatpush.msra.mxu0 %v897
        %919 = vmatmul.f32.gmra.mxu0 %v895
        %v920 = vpop.f32.mrf.mxu0
        %v921 = vadd.f32 0.0, %v920
        %922 = vdwg.mxu0
        %923 = vmatpush.msra.mxu0 0.0
        %924 = vmatpush.msra.mxu0 0.0
        %925 = vmatpush.msra.mxu0 0.0
        %926 = vmatpush.msra.mxu0 0.0
        %927 = vmatpush.msra.mxu0 0.0
        %928 = vmatpush.msra.mxu0 0.0
        %929 = vmatpush.msra.mxu0 0.0
        %930 = vmatpush.msra.mxu0 0.0
        %931 = vmatpush.msra.mxu0 0.0
        %932 = vmatpush.msra.mxu0 0.0
        %933 = vmatpush.msra.mxu0 0.0
        %934 = vmatpush.msra.mxu0 0.0
        %935 = vmatpush.msra.mxu0 0.0
        %936 = vmatpush.msra.mxu0 0.0
        %937 = vmatpush.msra.mxu0 0.0
        %938 = vmatpush.msra.mxu0 %v899
        %939 = vmatmul.f32.gmra.mxu0 %v895
        %v940 = vpop.f32.mrf.mxu0
        %v941 = vadd.f32 0.0, %v940
        %942 = vdwg.mxu0
        %943 = vmatpush.msra.mxu0 0.0
        %944 = vmatpush.msra.mxu0 0.0
        %945 = vmatpush.msra.mxu0 0.0
        %946 = vmatpush.msra.mxu0 0.0
        %947 = vmatpush.msra.mxu0 0.0
        %948 = vmatpush.msra.mxu0 0.0
        %949 = vmatpush.msra.mxu0 0.0
        %950 = vmatpush.msra.mxu0 0.0
        %951 = vmatpush.msra.mxu0 0.0
        %952 = vmatpush.msra.mxu0 0.0
        %953 = vmatpush.msra.mxu0 0.0
        %954 = vmatpush.msra.mxu0 0.0
        %955 = vmatpush.msra.mxu0 0.0
        %956 = vmatpush.msra.mxu0 0.0
        %957 = vmatpush.msra.mxu0 0.0
        %958 = vmatpush.msra.mxu0 %v901
        %959 = vmatmul.f32.gmra.mxu0 %v895
        %v960 = vpop.f32.mrf.mxu0
        %v961 = vadd.f32 0.0, %v960
        %962 = vdwg.mxu0
        %v963 = vadd.f32 %v866, %v921
        %v964 = vadd.f32 %v867, %v941
        %v965 = vadd.f32 %v868, %v961
        %s966 = scalar_lea.vmem %s292, 56
        %v967 = vld [vmem:[%s966] sm:$0xff]
        %v968 = vld [vmem:[%s288] sm:$0xff]
        %v969 = vld [vmem:[%s288 + $0x8] sm:$0xff]
        %972 = vst [vmem:[#allocation1] ss:$2 sm:$0xff] %v968
        %s973 = scalar_lea.vmem [#allocation1], 16
        %974 = vst [vmem:[%s973] ss:$2 sm:$0xff] %v969
        %v975 = vld.sshfl [vmem:[#allocation1] sm:$0xff pattern:$0x75316420]
        %v976 = vld.sshfl [vmem:[#allocation1 + $0x8] sm:$0xff pattern:$0x75316420]
        %v977 = vld.sshfl [vmem:[#allocation1 + $0x10] sm:$0xff pattern:$0x75316420]
        %v978 = vld.sshfl [vmem:[#allocation1 + $0x18] sm:$0xff pattern:$0x75316420]
        %979 = vrot.lane.b32.xlu0 %v975, 91
        %v980 = vpop.permute.xlu0 %979
        %981 = vrot.lane.b32.xlu0 %v976, 91
        %v982 = vpop.permute.xlu0 %981
        %983 = vrot.lane.b32.xlu0 %v977, 91
        %v984 = vpop.permute.xlu0 %983
        %985 = vrot.lane.b32.xlu0 %v978, 91
        %v986 = vpop.permute.xlu0 %985
        %vm987 = vcmask 744448
        %v988 = vsel %vm987, %v980, %v982
        %v989 = vsel %vm987, %v982, %v984
        %v990 = vsel %vm987, %v984, %v986
        %v992 = vsel %vm333, %v967, 0
        %v994 = vsel %vm337, %v988, 0
        %v996 = vsel %vm337, %v989, 0
        %v998 = vsel %vm337, %v990, 0
        %1000 = vmatpush.msra.mxu0 0.0
        %1001 = vmatpush.msra.mxu0 0.0
        %1002 = vmatpush.msra.mxu0 0.0
        %1003 = vmatpush.msra.mxu0 0.0
        %1004 = vmatpush.msra.mxu0 0.0
        %1005 = vmatpush.msra.mxu0 0.0
        %1006 = vmatpush.msra.mxu0 0.0
        %1007 = vmatpush.msra.mxu0 0.0
        %1008 = vmatpush.msra.mxu0 0.0
        %1009 = vmatpush.msra.mxu0 0.0
        %1010 = vmatpush.msra.mxu0 0.0
        %1011 = vmatpush.msra.mxu0 0.0
        %1012 = vmatpush.msra.mxu0 0.0
        %1013 = vmatpush.msra.mxu0 0.0
        %1014 = vmatpush.msra.mxu0 0.0
        %1015 = vmatpush.msra.mxu0 %v994
        %1016 = vmatmul.f32.gmra.mxu0 %v992
        %v1017 = vpop.f32.mrf.mxu0
        %v1018 = vadd.f32 0.0, %v1017
        %1019 = vdwg.mxu0
        %1020 = vmatpush.msra.mxu0 0.0
        %1021 = vmatpush.msra.mxu0 0.0
        %1022 = vmatpush.msra.mxu0 0.0
        %1023 = vmatpush.msra.mxu0 0.0
        %1024 = vmatpush.msra.mxu0 0.0
        %1025 = vmatpush.msra.mxu0 0.0
        %1026 = vmatpush.msra.mxu0 0.0
        %1027 = vmatpush.msra.mxu0 0.0
        %1028 = vmatpush.msra.mxu0 0.0
        %1029 = vmatpush.msra.mxu0 0.0
        %1030 = vmatpush.msra.mxu0 0.0
        %1031 = vmatpush.msra.mxu0 0.0
        %1032 = vmatpush.msra.mxu0 0.0
        %1033 = vmatpush.msra.mxu0 0.0
        %1034 = vmatpush.msra.mxu0 0.0
        %1035 = vmatpush.msra.mxu0 %v996
        %1036 = vmatmul.f32.gmra.mxu0 %v992
        %v1037 = vpop.f32.mrf.mxu0
        %v1038 = vadd.f32 0.0, %v1037
        %1039 = vdwg.mxu0
        %1040 = vmatpush.msra.mxu0 0.0
        %1041 = vmatpush.msra.mxu0 0.0
        %1042 = vmatpush.msra.mxu0 0.0
        %1043 = vmatpush.msra.mxu0 0.0
        %1044 = vmatpush.msra.mxu0 0.0
        %1045 = vmatpush.msra.mxu0 0.0
        %1046 = vmatpush.msra.mxu0 0.0
        %1047 = vmatpush.msra.mxu0 0.0
        %1048 = vmatpush.msra.mxu0 0.0
        %1049 = vmatpush.msra.mxu0 0.0
        %1050 = vmatpush.msra.mxu0 0.0
        %1051 = vmatpush.msra.mxu0 0.0
        %1052 = vmatpush.msra.mxu0 0.0
        %1053 = vmatpush.msra.mxu0 0.0
        %1054 = vmatpush.msra.mxu0 0.0
        %1055 = vmatpush.msra.mxu0 %v998
        %1056 = vmatmul.f32.gmra.mxu0 %v992
        %v1057 = vpop.f32.mrf.mxu0
        %v1058 = vadd.f32 0.0, %v1057
        %1059 = vdwg.mxu0
        %v1060 = vadd.f32 %v963, %v1018
        %v1061 = vadd.f32 %v964, %v1038
        %v1062 = vadd.f32 %v965, %v1058
        %s1063 = scalar_lea.vmem %s292, 64
        %v1064 = vld [vmem:[%s1063] sm:$0xff]
        %v1065 = vld [vmem:[%s288] sm:$0xff]
        %v1066 = vld [vmem:[%s288 + $0x8] sm:$0xff]
        %1069 = vst [vmem:[#allocation1] ss:$2 sm:$0xff] %v1065
        %s1070 = scalar_lea.vmem [#allocation1], 16
        %1071 = vst [vmem:[%s1070] ss:$2 sm:$0xff] %v1066
        %v1072 = vld.sshfl [vmem:[#allocation1] sm:$0xff pattern:$0x75316420]
        %v1073 = vld.sshfl [vmem:[#allocation1 + $0x8] sm:$0xff pattern:$0x75316420]
        %v1074 = vld.sshfl [vmem:[#allocation1 + $0x10] sm:$0xff pattern:$0x75316420]
        %v1075 = vld.sshfl [vmem:[#allocation1 + $0x18] sm:$0xff pattern:$0x75316420]
        %1076 = vrot.lane.b32.xlu0 %v1072, 90
        %v1077 = vpop.permute.xlu0 %1076
        %1078 = vrot.lane.b32.xlu0 %v1073, 90
        %v1079 = vpop.permute.xlu0 %1078
        %1080 = vrot.lane.b32.xlu0 %v1074, 90
        %v1081 = vpop.permute.xlu0 %1080
        %1082 = vrot.lane.b32.xlu0 %v1075, 90
        %v1083 = vpop.permute.xlu0 %1082
        %vm1084 = vcmask 736256
        %v1085 = vsel %vm1084, %v1077, %v1079
        %v1086 = vsel %vm1084, %v1079, %v1081
        %v1087 = vsel %vm1084, %v1081, %v1083
        %v1089 = vsel %vm333, %v1064, 0
        %v1091 = vsel %vm337, %v1085, 0
        %v1093 = vsel %vm337, %v1086, 0
        %v1095 = vsel %vm337, %v1087, 0
        %1097 = vmatpush.msra.mxu0 0.0
        %1098 = vmatpush.msra.mxu0 0.0
        %1099 = vmatpush.msra.mxu0 0.0
        %1100 = vmatpush.msra.mxu0 0.0
        %1101 = vmatpush.msra.mxu0 0.0
        %1102 = vmatpush.msra.mxu0 0.0
        %1103 = vmatpush.msra.mxu0 0.0
        %1104 = vmatpush.msra.mxu0 0.0
        %1105 = vmatpush.msra.mxu0 0.0
        %1106 = vmatpush.msra.mxu0 0.0
        %1107 = vmatpush.msra.mxu0 0.0
        %1108 = vmatpush.msra.mxu0 0.0
        %1109 = vmatpush.msra.mxu0 0.0
        %1110 = vmatpush.msra.mxu0 0.0
        %1111 = vmatpush.msra.mxu0 0.0
        %1112 = vmatpush.msra.mxu0 %v1091
        %1113 = vmatmul.f32.gmra.mxu0 %v1089
        %v1114 = vpop.f32.mrf.mxu0
        %v1115 = vadd.f32 0.0, %v1114
        %1116 = vdwg.mxu0
        %1117 = vmatpush.msra.mxu0 0.0
        %1118 = vmatpush.msra.mxu0 0.0
        %1119 = vmatpush.msra.mxu0 0.0
        %1120 = vmatpush.msra.mxu0 0.0
        %1121 = vmatpush.msra.mxu0 0.0
        %1122 = vmatpush.msra.mxu0 0.0
        %1123 = vmatpush.msra.mxu0 0.0
        %1124 = vmatpush.msra.mxu0 0.0
        %1125 = vmatpush.msra.mxu0 0.0
        %1126 = vmatpush.msra.mxu0 0.0
        %1127 = vmatpush.msra.mxu0 0.0
        %1128 = vmatpush.msra.mxu0 0.0
        %1129 = vmatpush.msra.mxu0 0.0
        %1130 = vmatpush.msra.mxu0 0.0
        %1131 = vmatpush.msra.mxu0 0.0
        %1132 = vmatpush.msra.mxu0 %v1093
        %1133 = vmatmul.f32.gmra.mxu0 %v1089
        %v1134 = vpop.f32.mrf.mxu0
        %v1135 = vadd.f32 0.0, %v1134
        %1136 = vdwg.mxu0
        %1137 = vmatpush.msra.mxu0 0.0
        %1138 = vmatpush.msra.mxu0 0.0
        %1139 = vmatpush.msra.mxu0 0.0
        %1140 = vmatpush.msra.mxu0 0.0
        %1141 = vmatpush.msra.mxu0 0.0
        %1142 = vmatpush.msra.mxu0 0.0
        %1143 = vmatpush.msra.mxu0 0.0
        %1144 = vmatpush.msra.mxu0 0.0
        %1145 = vmatpush.msra.mxu0 0.0
        %1146 = vmatpush.msra.mxu0 0.0
        %1147 = vmatpush.msra.mxu0 0.0
        %1148 = vmatpush.msra.mxu0 0.0
        %1149 = vmatpush.msra.mxu0 0.0
        %1150 = vmatpush.msra.mxu0 0.0
        %1151 = vmatpush.msra.mxu0 0.0
        %1152 = vmatpush.msra.mxu0 %v1095
        %1153 = vmatmul.f32.gmra.mxu0 %v1089
        %v1154 = vpop.f32.mrf.mxu0
        %v1155 = vadd.f32 0.0, %v1154
        %1156 = vdwg.mxu0
        %v1157 = vadd.f32 %v1060, %v1115
        %v1158 = vadd.f32 %v1061, %v1135
        %v1159 = vadd.f32 %v1062, %v1155
        %v1160 = vld [vmem:[%s296] sm:$0xff]
        %1162 = vset.pattern.permute.xlu0 0
        %1163 = vperm.xlu0 %1162, %v1160
        %v1164 = vpop.permute.xlu0 %1163
        %v1166 = vadd.f32 %v1157, %v1164
        %v1167 = vadd.f32 %v1158, %v1164
        %v1168 = vadd.f32 %v1159, %v1164
        %v1169 = vmax.f32 %v1166, 0.0
        %v1170 = vmax.f32 %v1167, 0.0
        %v1171 = vmax.f32 %v1168, 0.0
        %v1172 = vld [vmem:[%s300] sm:$0xff]
        %v1173 = vld [vmem:[%s304] sm:$0xff]
        %1175 = vset.pattern.permute.xlu0 0
        %1176 = vperm.xlu0 %1175, %v1173
        %v1177 = vpop.permute.xlu0 %1176
        %1179 = vst [vmem:[#allocation1] ss:$2 sm:$0xff] %v677
        %s1180 = scalar_lea.vmem [#allocation1], 16
        %1181 = vst [vmem:[%s1180] ss:$2 sm:$0xff] %v678
        %v1182 = vld.sshfl [vmem:[#allocation1] sm:$0xff pattern:$0x75316420]
        %v1183 = vld.sshfl [vmem:[#allocation1 + $0x8] sm:$0xff pattern:$0x75316420]
        %v1184 = vld.sshfl [vmem:[#allocation1 + $0x10] sm:$0xff pattern:$0x75316420]
        %v1185 = vld.sshfl [vmem:[#allocation1 + $0x18] sm:$0xff pattern:$0x75316420]
        %1186 = vrot.lane.b32.xlu0 %v1182, 109
        %v1187 = vpop.permute.xlu0 %1186
        %1188 = vrot.lane.b32.xlu0 %v1183, 109
        %v1189 = vpop.permute.xlu0 %1188
        %1190 = vrot.lane.b32.xlu0 %v1184, 109
        %v1191 = vpop.permute.xlu0 %1190
        %1192 = vrot.lane.b32.xlu0 %v1185, 109
        %v1193 = vpop.permute.xlu0 %1192
        %v1194 = vsel %vm696, %v1187, %v1189
        %v1195 = vsel %vm696, %v1189, %v1191
        %v1196 = vsel %vm696, %v1191, %v1193
        %v1198 = vsel %vm333, %v1172, 0
        %v1200 = vsel %vm337, %v1194, 0
        %v1202 = vsel %vm337, %v1195, 0
        %v1204 = vsel %vm337, %v1196, 0
        %1206 = vmatpush.msra.mxu0 0.0
        %1207 = vmatpush.msra.mxu0 0.0
        %1208 = vmatpush.msra.mxu0 0.0
        %1209 = vmatpush.msra.mxu0 0.0
        %1210 = vmatpush.msra.mxu0 0.0
        %1211 = vmatpush.msra.mxu0 0.0
        %1212 = vmatpush.msra.mxu0 0.0
        %1213 = vmatpush.msra.mxu0 0.0
        %1214 = vmatpush.msra.mxu0 0.0
        %1215 = vmatpush.msra.mxu0 0.0
        %1216 = vmatpush.msra.mxu0 0.0
        %1217 = vmatpush.msra.mxu0 0.0
        %1218 = vmatpush.msra.mxu0 0.0
        %1219 = vmatpush.msra.mxu0 0.0
        %1220 = vmatpush.msra.mxu0 0.0
        %1221 = vmatpush.msra.mxu0 %v1200
        %1222 = vmatmul.f32.gmra.mxu0 %v1198
        %v1223 = vpop.f32.mrf.mxu0
        %v1224 = vadd.f32 %v1177, %v1223
        %1225 = vdwg.mxu0
        %1226 = vmatpush.msra.mxu0 0.0
        %1227 = vmatpush.msra.mxu0 0.0
        %1228 = vmatpush.msra.mxu0 0.0
        %1229 = vmatpush.msra.mxu0 0.0
        %1230 = vmatpush.msra.mxu0 0.0
        %1231 = vmatpush.msra.mxu0 0.0
        %1232 = vmatpush.msra.mxu0 0.0
        %1233 = vmatpush.msra.mxu0 0.0
        %1234 = vmatpush.msra.mxu0 0.0
        %1235 = vmatpush.msra.mxu0 0.0
        %1236 = vmatpush.msra.mxu0 0.0
        %1237 = vmatpush.msra.mxu0 0.0
        %1238 = vmatpush.msra.mxu0 0.0
        %1239 = vmatpush.msra.mxu0 0.0
        %1240 = vmatpush.msra.mxu0 0.0
        %1241 = vmatpush.msra.mxu0 %v1202
        %1242 = vmatmul.f32.gmra.mxu0 %v1198
        %v1243 = vpop.f32.mrf.mxu0
        %v1244 = vadd.f32 %v1177, %v1243
        %1245 = vdwg.mxu0
        %1246 = vmatpush.msra.mxu0 0.0
        %1247 = vmatpush.msra.mxu0 0.0
        %1248 = vmatpush.msra.mxu0 0.0
        %1249 = vmatpush.msra.mxu0 0.0
        %1250 = vmatpush.msra.mxu0 0.0
        %1251 = vmatpush.msra.mxu0 0.0
        %1252 = vmatpush.msra.mxu0 0.0
        %1253 = vmatpush.msra.mxu0 0.0
        %1254 = vmatpush.msra.mxu0 0.0
        %1255 = vmatpush.msra.mxu0 0.0
        %1256 = vmatpush.msra.mxu0 0.0
        %1257 = vmatpush.msra.mxu0 0.0
        %1258 = vmatpush.msra.mxu0 0.0
        %1259 = vmatpush.msra.mxu0 0.0
        %1260 = vmatpush.msra.mxu0 0.0
        %1261 = vmatpush.msra.mxu0 %v1204
        %1262 = vmatmul.f32.gmra.mxu0 %v1198
        %v1263 = vpop.f32.mrf.mxu0
        %v1264 = vadd.f32 %v1177, %v1263
        %1265 = vdwg.mxu0
        %v1266 = vadd.f32 %v1169, %v1224
        %v1267 = vadd.f32 %v1170, %v1244
        %v1268 = vadd.f32 %v1171, %v1264
        %1269 = vst [vmem:[%s283] sm:$0xff] %v1266
        %1270 = vst [vmem:[%s283 + $0x8] sm:$0xff] %v1267
        %1271 = vst [vmem:[%s283 + $0x10] sm:$0xff] %v1268
        %s1272 = sand.u32 %s171, 1
        %s1273 = scalar_lea.sflag [#allocation3], %s1272
        %s1274 = sand.u32 %s171, 1
        %s1275 = smul.addr %s1274, 24
        %s1276 = scalar_lea.vmem [#allocation2], %s1275
        // Predicated region
        $region41: #{tpu_custom_call.1} parent=39 // pred_check
          %p1277 = pneg %p181
        $region42: #{tpu_custom_call.1} parent=39 // pred_check_branch
          %1279 = sbr.rel (%p1277) target = $region44
        $region43: #{tpu_custom_call.1} parent=39 // pred_region
          %1281 = vsyncadd %s1273, 0
          %s1282 = smul.addr %s24, 3
          %s1283 = smul.addr %s23, 3
          %s1284 = sadd.s32 %s1282, %s1283
          %s1285 = smul.addr %s1284, 8
          %s1286 = scalar_lea.hbm %s5, %s1285
          %s1288 = sshll.u32 %s1276, 4
          %s1289 = int_to_ptr.vmem [resolvable:$true] %s1288
          %s1290 = sshll.u32 %s1286, 4
          %s1291 = int_to_ptr.hbm [resolvable:$true] %s1290
          %1293 = dma.vmem_to_hbm [thread:$0]  %s1289, 384, %s1291, %s1273
        $region44: #{tpu_custom_call.1} parent=39 // pred_fallthru
          _
      $region40: #{tpu_custom_call.1} parent=5 // pred_fallthru
        _
      %p1294 = scmp.le.s32.totalorder 2, %s14
      // Predicated region
      $region45: #{tpu_custom_call.1} parent=5 // pred_check
        %p1295 = pneg %p1294
      $region46: #{tpu_custom_call.1} parent=5 // pred_check_branch
        %1297 = sbr.rel (%p1295) target = $region48
      $region47: #{tpu_custom_call.1} parent=5 // pred_region
        %s1298 = ssub.s32 %s14, 2
        // Predicated region
        $region49: #{tpu_custom_call.1} parent=47 // pred_check
          %p1299 = pneg %p187
        $region50: #{tpu_custom_call.1} parent=47 // pred_check_branch
          %1301 = sbr.rel (%p1299) target = $region52
        $region51: #{tpu_custom_call.1} parent=47 // pred_region
          %s1302 = sand.u32 %s172, 1
          %s1303 = scalar_lea.sflag [#allocation3], %s1302
          %s1304 = sand.u32 %s172, 1
          %s1305 = smul.addr %s1304, 24
          %s1306 = scalar_lea.vmem [#allocation2], %s1305
          %1308 = dma.done %s1303, 384
        $region52: #{tpu_custom_call.1} parent=47 // pred_fallthru
          _
      $region48: #{tpu_custom_call.1} parent=5 // pred_fallthru
        _
    $region6: #{tpu_custom_call.1} parent=1 // loop_footer
      %s18 = sadd.s32 1, %s14
    $region7: #{tpu_custom_call.1} parent=1 // loop_footer_branch
      %13 = sbr.rel target = $region3
    $region8: #{tpu_custom_call.1} parent=1 // loop_exit
      _
    %1309 = vsyncpa [#allocation3], 1
    %s1310 = scalar_lea.sflag [#allocation3], 1
    %1311 = vsyncpa %s1310, 1

</llo_original>
